<compile_context>
chip_gen: v5e
topology: v5e:2x2
jax: 0.10.0
libtpu: 0.0.40
codegen_flags: <defaults>
</compile_context>

<pallas_src>
import functools
import math

import jax
import jax.numpy as jnp
from jax.experimental import pallas as pl
from jax.experimental.pallas import tpu as pltpu

# MXU operand dtype for the Linear layers (f32 accumulate, f32 elementwise).
MXU_DTYPE = jnp.bfloat16

# Latent dim lane-padded to a full vreg lane width so z / head outputs are
# lane-dense.  Padded weight columns, biases and noise lanes are exactly zero,
# so padded lanes contribute 0 to reparam, KLD and the decoder.
Z_PAD = 128


# ----------------------- fused forward (enc + dec + loss) -------------------

def _dense(h, w_ref, b_ref, *, elu):
    """h @ W + b (+ optional ELU). Activations cast to the stored weight dtype
    only at the MXU boundary; accumulation and elementwise math stay f32."""
    w = w_ref[...]
    y = jnp.dot(h.astype(w.dtype), w, preferred_element_type=jnp.float32)
    y = y + b_ref[...]
    if elu:
        # ELU(alpha=1): y if y > 0 else exp(y) - 1
        y = jnp.where(y > 0.0, y, jnp.exp(jnp.minimum(y, 0.0)) - 1.0)
    return y


def _make_vae_fwd_kernel(n_enc, n_dec, z_pad, input_dim):
    """Whole VAE forward in a single kernel; activations never leave VMEM."""

    def kernel(*refs):
        it = iter(refs)
        x_ref = next(it)
        noise_ref = next(it)
        enc = [(next(it), next(it)) for _ in range(n_enc)]
        ehw, ehb = next(it), next(it)          # combined (mean | log_std) head
        dec = [(next(it), next(it)) for _ in range(n_dec)]
        dhw, dhb = next(it), next(it)          # combined (mean | log_std) head
        z_ref = next(it)
        elbo_ref = next(it)

        @pl.when(pl.program_id(0) == 0)
        def _():
            elbo_ref[...] = jnp.zeros_like(elbo_ref)

        x = x_ref[...]                                        # (TB, D) f32

        # ---- encoder stack + combined head ----
        h = x
        for w, b in enc:
            h = _dense(h, w, b, elu=True)
        heads = _dense(h, ehw, ehb, elu=False)                # (TB, 2*z_pad)
        means = heads[:, :z_pad]
        log_stds = heads[:, z_pad:]

        # ---- reparameterize (noise supplied externally, zero in padded lanes) ----
        z = means + jnp.exp(log_stds) * noise_ref[...]
        z_ref[...] = z

        # ---- decoder stack + combined head ----
        h = z
        for w, b in dec:
            h = _dense(h, w, b, elu=True)
        dheads = _dense(h, dhw, dhb, elu=False)               # (TB, 2*input_dim)
        dec_mean = dheads[:, :input_dim]
        dec_log_std = dheads[:, input_dim:]

        # ---- Student-t (df=2) log-likelihood, summed over features ----
        df = 2.0
        const = (math.lgamma((df + 1.0) / 2.0) - math.lgamma(df / 2.0)
                 - 0.5 * math.log(df * math.pi))
        t = (x - dec_mean) * jnp.exp(-dec_log_std)
        logp = const - dec_log_std - 0.5 * (df + 1.0) * jnp.log(1.0 + t * t / df)
        ll = jnp.sum(logp, axis=1, keepdims=True)             # (TB, 1)

        # ---- KL(N(mu, exp(log_std)) || N(0,1)), summed over latent dims ----
        kld = 0.5 * jnp.sum(means * means + jnp.exp(2.0 * log_stds)
                            - 2.0 * log_stds - 1.0, axis=1, keepdims=True)

        # accumulate sum_b (ll - kld) into the resident (1,1) accumulator block
        elbo_ref[...] += jnp.sum(ll - kld, keepdims=True)

    return kernel


def vae_forward_core(params, x, noise_pad):
    B, D = x.shape
    ZP = noise_pad.shape[1]
    n_enc = len(params["enc"])
    n_dec = len(params["dec"])

    flat_w = []
    for w, b in params["enc"]:
        flat_w += [w, b]
    flat_w += [params["enc_head_w"], params["enc_head_b"]]
    for w, b in params["dec"]:
        flat_w += [w, b]
    flat_w += [params["dec_head_w"], params["dec_head_b"]]

    # Batch-row tiling (single block for small batches; 128-row blocks at scale).
    TB = 128 if (B % 128 == 0) else B
    grid = (B // TB,)

    in_specs = ([pl.BlockSpec((TB, D), lambda i: (i, 0)),
                 pl.BlockSpec((TB, ZP), lambda i: (i, 0))]
                + [pl.BlockSpec(w.shape, lambda i: (0, 0)) for w in flat_w])
    out_specs = (pl.BlockSpec((TB, ZP), lambda i: (i, 0)),
                 pl.BlockSpec((1, 1), lambda i: (0, 0)))
    out_shape = (jax.ShapeDtypeStruct((B, ZP), jnp.float32),
                 jax.ShapeDtypeStruct((1, 1), jnp.float32))

    z, elbo_sum = pl.pallas_call(
        _make_vae_fwd_kernel(n_enc, n_dec, ZP, D),
        grid=grid,
        in_specs=in_specs,
        out_specs=out_specs,
        out_shape=out_shape,
        compiler_params=pltpu.CompilerParams(
            dimension_semantics=("arbitrary",)),   # elbo accumulates across blocks
    )(x, noise_pad, *flat_w)
    return z, elbo_sum[0, 0] / B


# --------------------- fused t-SNE repel (pdist + P + cost) -----------------

def _tsne_repel_kernel(xb_ref, xa_ref, xs_ref, zb_ref, za_ref, zs_ref, out_ref, *,
                       nu, batch, perplexity, block_rows, iters):
    i = pl.program_id(0)

    @pl.when(i == 0)
    def _():
        out_ref[...] = jnp.zeros_like(out_ref)

    # ---- pairwise squared distances of this x row-block vs all rows ----
    xb = xb_ref[...]                                              # (TB, D)
    xa = xa_ref[...]                                              # (B, D)
    rb = jnp.sum(xb * xb, axis=1, keepdims=True)                  # (TB, 1)
    gram = jax.lax.dot_general(xb, xa, (((1,), (1,)), ((), ())),
                               preferred_element_type=jnp.float32)
    d2 = jnp.maximum(rb + xs_ref[...] - 2.0 * gram, 0.0)          # clamp fp cancellation

    rows = i * block_rows + jax.lax.broadcasted_iota(jnp.int32, d2.shape, 0)
    cols = jax.lax.broadcasted_iota(jnp.int32, d2.shape, 1)
    mask = (rows != cols).astype(jnp.float32)                     # zero the diagonal

    # ---- perplexity-matched conditional probabilities (per-row bisection),
    #      D/P rows stay resident in VMEM across all iterations ----
    logU = math.log(perplexity)

    def hbeta(beta):
        P = jnp.exp(-d2 * beta) * mask
        sumP = jnp.maximum(jnp.sum(P, axis=1, keepdims=True), 1e-12)
        H = jnp.log(sumP) + beta * jnp.sum(d2 * P, axis=1, keepdims=True) / sumP
        return H, P, sumP

    def body(_, state):
        beta, bmin, bmax = state
        H, _, _ = hbeta(beta)
        Hdiff = H - logU
        new_bmin = jnp.where(Hdiff > 0, beta, bmin)
        new_bmax = jnp.where(Hdiff > 0, bmax, beta)
        beta_up = jnp.where(new_bmax == jnp.inf, beta * 2.0, (beta + new_bmax) * 0.5)
        beta_dn = jnp.where(new_bmin == -jnp.inf, beta * 0.5, (beta + new_bmin) * 0.5)
        return jnp.where(Hdiff > 0, beta_up, beta_dn), new_bmin, new_bmax

    shp = (d2.shape[0], 1)
    beta, _, _ = jax.lax.fori_loop(
        0, iters, body,
        (jnp.ones(shp, jnp.float32),
         jnp.full(shp, -jnp.inf, jnp.float32),
         jnp.full(shp, jnp.inf, jnp.float32)))
    _, P, sumP = hbeta(beta)
    P = P / sumP

    # ---- scvis t-SNE repel cost for this row block ----
    P = P + 0.1 / batch
    P = P / jnp.sum(P, axis=1, keepdims=True)

    zb = zb_ref[...]                                              # (TB, ZP)
    za = za_ref[...]                                              # (B, ZP)
    zrb = jnp.sum(zb * zb, axis=1, keepdims=True)
    zgram = jax.lax.dot_general(zb, za, (((1,), (1,)), ((), ())),
                                preferred_element_type=jnp.float32)
    num = jnp.maximum(zrb + zs_ref[...] - 2.0 * zgram, 0.0) / nu
    log_num = -((nu + 1.0) / 2.0) * jnp.log(1.0 + num)            # log((1+num)^-(nu+1)/2)
    num_pow = jnp.exp(log_num)

    attraction = -jnp.sum(P * log_num, keepdims=True)                      # (1, 1)
    den = jnp.maximum(jnp.sum(num_pow, axis=1, keepdims=True) - 1.0, 1e-12)
    repellant = jnp.sum(jnp.log(den), keepdims=True)                       # (1, 1)

    out_ref[...] += (repellant + attraction) / batch


def tsne_repel(x, z, z_dim, perplexity, *, iters=50):
    # TODO(synk): the original torch tsne_repel helper was not provided; follows the
    # scvis reference (nu = z_dim - 1, P from perplexity-matched conditional probs).
    B, Dx = x.shape
    ZP = z.shape[1]
    nu = float(z_dim - 1)
    TB = 256 if (B % 256 == 0) else B
    grid = (B // TB,)

    # Row sq-norms precomputed ONCE in (1, B) orientation so the kernel never
    # needs a per-block XLU transpose of its row sums (tiny XLA glue).
    xs = jnp.sum(x * x, axis=1)[None, :]
    zs = jnp.sum(z * z, axis=1)[None, :]

    kernel = functools.partial(_tsne_repel_kernel, nu=nu, batch=float(B),
                               perplexity=float(perplexity), block_rows=TB,
                               iters=iters)
    out = pl.pallas_call(
        kernel,
        grid=grid,
        in_specs=[pl.BlockSpec((TB, Dx), lambda i: (i, 0)),
                  pl.BlockSpec((B, Dx), lambda i: (0, 0)),
                  pl.BlockSpec((1, B), lambda i: (0, 0)),
                  pl.BlockSpec((TB, ZP), lambda i: (i, 0)),
                  pl.BlockSpec((B, ZP), lambda i: (0, 0)),
                  pl.BlockSpec((1, B), lambda i: (0, 0))],
        out_specs=pl.BlockSpec((1, 1), lambda i: (0, 0)),
        out_shape=jax.ShapeDtypeStruct((1, 1), jnp.float32),
        compiler_params=pltpu.CompilerParams(
            dimension_semantics=("arbitrary",)),   # cost accumulates across row blocks
    )(x, x, xs, z, z, zs)
    return out[0, 0]


# ------------------------------- params / wrapper ---------------------------

def _init_linear(key, fan_in, fan_out):
    # Matches torch.nn.Linear default init (uniform +- 1/sqrt(fan_in)).
    # Weight stored as [in, out] (transpose of torch's [out, in]) for x @ W.
    k = 1.0 / math.sqrt(fan_in)
    kw, kb = jax.random.split(key)
    w = jax.random.uniform(kw, (fan_in, fan_out), jnp.float32, -k, k)
    b = jax.random.uniform(kb, (fan_out,), jnp.float32, -k, k)
    return w, b


def init_vae_params(key, input_dim, encoder_dims, decoder_dims, z_dim, z_pad=Z_PAD):
    n_enc, n_dec = len(encoder_dims), len(decoder_dims)
    keys = iter(jax.random.split(key, n_enc + n_dec + 4))
    params = {"enc": [], "dec": []}

    dims = [input_dim] + list(encoder_dims)
    for i in range(n_enc):
        w, b = _init_linear(next(keys), dims[i], dims[i + 1])
        params["enc"].append((w.astype(MXU_DTYPE), b[None, :]))

    # Combined (mean | log_std) encoder head, lane-padded to 2 * z_pad (zeros).
    mw, mb = _init_linear(next(keys), dims[-1], z_dim)
    sw, sb = _init_linear(next(keys), dims[-1], z_dim)
    hw = jnp.zeros((dims[-1], 2 * z_pad), jnp.float32)
    hw = hw.at[:, :z_dim].set(mw).at[:, z_pad:z_pad + z_dim].set(sw)
    hb = jnp.zeros((1, 2 * z_pad), jnp.float32)
    hb = hb.at[0, :z_dim].set(mb).at[0, z_pad:z_pad + z_dim].set(sb)
    params["enc_head_w"] = hw.astype(MXU_DTYPE)
    params["enc_head_b"] = hb

    ddims = [z_dim] + list(decoder_dims)
    for i in range(n_dec):
        w, b = _init_linear(next(keys), ddims[i], ddims[i + 1])
        if i == 0:  # zero-pad the latent fan-in rows to z_pad
            w = jnp.zeros((z_pad, ddims[1]), jnp.float32).at[:z_dim, :].set(w)
        params["dec"].append((w.astype(MXU_DTYPE), b[None, :]))

    # Combined (mean | log_std) decoder head: [hidden, 2 * input_dim].
    mw, mb = _init_linear(next(keys), ddims[-1], input_dim)
    sw, sb = _init_linear(next(keys), ddims[-1], input_dim)
    params["dec_head_w"] = jnp.concatenate([mw, sw], axis=1).astype(MXU_DTYPE)
    params["dec_head_b"] = jnp.concatenate([mb, sb])[None, :]
    return params


def vae_forward(params, imgs, noise, *, z_dim, perplexity):
    if z_dim < 2:
        raise ValueError("z_dim must be >= 2 (t-SNE repel uses nu = z_dim - 1)")
    B = imgs.shape[0]
    x = imgs.reshape(B, -1).astype(jnp.float32)
    ZP = params["enc_head_b"].shape[1] // 2
    noise_pad = jnp.pad(noise.astype(jnp.float32), ((0, 0), (0, ZP - z_dim)))

    z, elbo = vae_forward_core(params, x, noise_pad)          # fused enc/dec/loss
    tsne_cost = tsne_repel(x, z, z_dim, perplexity)           # fused pdist/P/cost
    cost = float(x.shape[1]) * tsne_cost - elbo               # scalar glue
    return cost, elbo, tsne_cost


if __name__ == "__main__":
    B, C, H, W = 8, 4, 4, 4
    input_dim = C * H * W
    encoder_dims = [32, 16]
    decoder_dims = [16, 32]
    z_dim = 2
    perplexity = 3.0  # TODO(synk): original perplexity hyperparameter not shown; small value for batch=8.

    root = jax.random.PRNGKey(0)
    k_params, k_imgs, k_noise = jax.random.split(root, 3)
    params = init_vae_params(k_params, input_dim, encoder_dims, decoder_dims, z_dim)
    imgs = jax.random.uniform(k_imgs, (B, C, H, W), jnp.float32)
    noise = jax.random.normal(k_noise, (B, z_dim), jnp.float32)  # torch.randn equivalent

    fwd = jax.jit(functools.partial(vae_forward, z_dim=z_dim, perplexity=perplexity))
    cost, elbo, tsne_cost = fwd(params, imgs, noise)
    jax.block_until_ready((cost, elbo, tsne_cost))
    print("KERNEL_OK")
</pallas_src>

<mosaic_0001>
module attributes {stable_mosaic.version = 11 : i64} {
  func.func @kernel(%arg0: i32, %arg1: memref<8x64xf32, #tpu.memory_space<vmem>>, %arg2: memref<8x128xf32, #tpu.memory_space<vmem>>, %arg3: memref<64x32xbf16, #tpu.memory_space<vmem>>, %arg4: memref<1x32xf32, #tpu.memory_space<vmem>>, %arg5: memref<32x16xbf16, #tpu.memory_space<vmem>>, %arg6: memref<1x16xf32, #tpu.memory_space<vmem>>, %arg7: memref<16x256xbf16, #tpu.memory_space<vmem>>, %arg8: memref<1x256xf32, #tpu.memory_space<vmem>>, %arg9: memref<128x16xbf16, #tpu.memory_space<vmem>>, %arg10: memref<1x16xf32, #tpu.memory_space<vmem>>, %arg11: memref<16x32xbf16, #tpu.memory_space<vmem>>, %arg12: memref<1x32xf32, #tpu.memory_space<vmem>>, %arg13: memref<32x128xbf16, #tpu.memory_space<vmem>>, %arg14: memref<1x128xf32, #tpu.memory_space<vmem>>, %arg15: memref<8x128xf32, #tpu.memory_space<vmem>>, %arg16: memref<1x1xf32, #tpu.memory_space<vmem>>) attributes {dimension_semantics = [#tpu.dimension_semantics<arbitrary>], iteration_bounds = array<i64: 1>, scalar_prefetch = 0 : i64, scratch_operands = 0 : i64, tpu.core_type = #tpu.core_type<tc>, window_params = [{transform_indices = @transform_0, window_bounds = array<i64: 8, 64>}, {transform_indices = @transform_1, window_bounds = array<i64: 8, 128>}, {pipeline_mode = #tpu.pipeline_mode<synchronous>, transform_indices = @transform_2, window_bounds = array<i64: 64, 32>}, {pipeline_mode = #tpu.pipeline_mode<synchronous>, transform_indices = @transform_3, window_bounds = array<i64: 1, 32>}, {pipeline_mode = #tpu.pipeline_mode<synchronous>, transform_indices = @transform_4, window_bounds = array<i64: 32, 16>}, {pipeline_mode = #tpu.pipeline_mode<synchronous>, transform_indices = @transform_5, window_bounds = array<i64: 1, 16>}, {pipeline_mode = #tpu.pipeline_mode<synchronous>, transform_indices = @transform_6, window_bounds = array<i64: 16, 256>}, {pipeline_mode = #tpu.pipeline_mode<synchronous>, transform_indices = @transform_7, window_bounds = array<i64: 1, 256>}, {pipeline_mode = #tpu.pipeline_mode<synchronous>, transform_indices = @transform_8, window_bounds = array<i64: 128, 16>}, {pipeline_mode = #tpu.pipeline_mode<synchronous>, transform_indices = @transform_9, window_bounds = array<i64: 1, 16>}, {pipeline_mode = #tpu.pipeline_mode<synchronous>, transform_indices = @transform_10, window_bounds = array<i64: 16, 32>}, {pipeline_mode = #tpu.pipeline_mode<synchronous>, transform_indices = @transform_11, window_bounds = array<i64: 1, 32>}, {pipeline_mode = #tpu.pipeline_mode<synchronous>, transform_indices = @transform_12, window_bounds = array<i64: 32, 128>}, {pipeline_mode = #tpu.pipeline_mode<synchronous>, transform_indices = @transform_13, window_bounds = array<i64: 1, 128>}, {transform_indices = @transform_14, window_bounds = array<i64: 8, 128>}, {pipeline_mode = #tpu.pipeline_mode<synchronous>, transform_indices = @transform_15, window_bounds = array<i64: 1, 1>}]} {
    %c0_i32 = arith.constant 0 : i32
    %0 = arith.cmpi eq, %arg0, %c0_i32 : i32
    %1 = arith.extui %0 : i1 to i32
    %c0_i32_0 = arith.constant 0 : i32
    %2 = arith.cmpi ne, %1, %c0_i32_0 : i32
    scf.if %2 {
      %cst_63 = arith.constant 0.000000e+00 : f32
      %122 = vector.broadcast %cst_63 : f32 to vector<1x1xf32>
      %c0_64 = arith.constant 0 : index
      %c0_65 = arith.constant 0 : index
      %123 = vector.load %arg16[%c0_64, %c0_65] : memref<1x1xf32, #tpu.memory_space<vmem>>, vector<1x1xf32>
      tpu.vector_store %arg16[%c0_64, %c0_65], %122 {strides = array<i32>} : memref<1x1xf32, #tpu.memory_space<vmem>>, vector<1x1xf32>,
    } else {
    }
    %c0 = arith.constant 0 : index
    %c0_1 = arith.constant 0 : index
    %3 = vector.load %arg1[%c0, %c0_1] : memref<8x64xf32, #tpu.memory_space<vmem>>, vector<8x64xf32>
    %c0_2 = arith.constant 0 : index
    %c0_3 = arith.constant 0 : index
    %4 = vector.load %arg3[%c0_2, %c0_3] : memref<64x32xbf16, #tpu.memory_space<vmem>>, vector<64x32xbf16>
    %5 = arith.truncf %3 : vector<8x64xf32> to vector<8x64xbf16>
    %cst = arith.constant dense<0.000000e+00> : vector<8x32xf32>
    %6 = tpu.matmul %5, %4, %cst {dimension_numbers = #tpu.dot_dimension_numbers<[1], [0], [0], [1], [0, 0, 1, 1], [], []>} : vector<8x64xbf16>, vector<64x32xbf16>, vector<8x32xf32> -> vector<8x32xf32>
    %c0_4 = arith.constant 0 : index
    %c0_5 = arith.constant 0 : index
    %7 = vector.load %arg4[%c0_4, %c0_5] : memref<1x32xf32, #tpu.memory_space<vmem>>, vector<1x32xf32>
    %8 = vector.broadcast %7 : vector<1x32xf32> to vector<8x32xf32>
    %9 = arith.addf %6, %8 : vector<8x32xf32>
    %cst_6 = arith.constant 0.000000e+00 : f32
    %10 = vector.broadcast %cst_6 : f32 to vector<8x32xf32>
    %11 = arith.cmpf ogt, %9, %10 : vector<8x32xf32>
    %cst_7 = arith.constant 0.000000e+00 : f32
    %12 = vector.broadcast %cst_7 : f32 to vector<8x32xf32>
    %13 = arith.minimumf %9, %12 : vector<8x32xf32>
    %14 = math.exp %13 : vector<8x32xf32>
    %cst_8 = arith.constant 1.000000e+00 : f32
    %15 = vector.broadcast %cst_8 : f32 to vector<8x32xf32>
    %16 = arith.subf %14, %15 : vector<8x32xf32>
    %17 = arith.select %11, %9, %16 : vector<8x32xi1>, vector<8x32xf32>
    %c0_9 = arith.constant 0 : index
    %c0_10 = arith.constant 0 : index
    %18 = vector.load %arg5[%c0_9, %c0_10] : memref<32x16xbf16, #tpu.memory_space<vmem>>, vector<32x16xbf16>
    %19 = arith.truncf %17 : vector<8x32xf32> to vector<8x32xbf16>
    %cst_11 = arith.constant dense<0.000000e+00> : vector<8x16xf32>
    %20 = tpu.matmul %19, %18, %cst_11 {dimension_numbers = #tpu.dot_dimension_numbers<[1], [0], [0], [1], [0, 0, 1, 1], [], []>} : vector<8x32xbf16>, vector<32x16xbf16>, vector<8x16xf32> -> vector<8x16xf32>
    %c0_12 = arith.constant 0 : index
    %c0_13 = arith.constant 0 : index
    %21 = vector.load %arg6[%c0_12, %c0_13] : memref<1x16xf32, #tpu.memory_space<vmem>>, vector<1x16xf32>
    %22 = vector.broadcast %21 : vector<1x16xf32> to vector<8x16xf32>
    %23 = arith.addf %20, %22 : vector<8x16xf32>
    %cst_14 = arith.constant 0.000000e+00 : f32
    %24 = vector.broadcast %cst_14 : f32 to vector<8x16xf32>
    %25 = arith.cmpf ogt, %23, %24 : vector<8x16xf32>
    %cst_15 = arith.constant 0.000000e+00 : f32
    %26 = vector.broadcast %cst_15 : f32 to vector<8x16xf32>
    %27 = arith.minimumf %23, %26 : vector<8x16xf32>
    %28 = math.exp %27 : vector<8x16xf32>
    %cst_16 = arith.constant 1.000000e+00 : f32
    %29 = vector.broadcast %cst_16 : f32 to vector<8x16xf32>
    %30 = arith.subf %28, %29 : vector<8x16xf32>
    %31 = arith.select %25, %23, %30 : vector<8x16xi1>, vector<8x16xf32>
    %c0_17 = arith.constant 0 : index
    %c0_18 = arith.constant 0 : index
    %32 = vector.load %arg7[%c0_17, %c0_18] : memref<16x256xbf16, #tpu.memory_space<vmem>>, vector<16x256xbf16>
    %33 = arith.truncf %31 : vector<8x16xf32> to vector<8x16xbf16>
    %cst_19 = arith.constant dense<0.000000e+00> : vector<8x256xf32>
    %34 = tpu.matmul %33, %32, %cst_19 {dimension_numbers = #tpu.dot_dimension_numbers<[1], [0], [0], [1], [0, 0, 1, 1], [], []>} : vector<8x16xbf16>, vector<16x256xbf16>, vector<8x256xf32> -> vector<8x256xf32>
    %c0_20 = arith.constant 0 : index
    %c0_21 = arith.constant 0 : index
    %35 = vector.load %arg8[%c0_20, %c0_21] : memref<1x256xf32, #tpu.memory_space<vmem>>, vector<1x256xf32>
    %36 = vector.broadcast %35 : vector<1x256xf32> to vector<8x256xf32>
    %37 = arith.addf %34, %36 : vector<8x256xf32>
    %38 = vector.extract_strided_slice %37 {offsets = [0, 0], sizes = [8, 128], strides = [1, 1]} : vector<8x256xf32> to vector<8x128xf32>
    %39 = vector.extract_strided_slice %37 {offsets = [0, 128], sizes = [8, 128], strides = [1, 1]} : vector<8x256xf32> to vector<8x128xf32>
    %40 = math.exp %39 : vector<8x128xf32>
    %c0_22 = arith.constant 0 : index
    %c0_23 = arith.constant 0 : index
    %41 = vector.load %arg2[%c0_22, %c0_23] : memref<8x128xf32, #tpu.memory_space<vmem>>, vector<8x128xf32>
    %42 = arith.mulf %40, %41 : vector<8x128xf32>
    %43 = arith.addf %38, %42 : vector<8x128xf32>
    %c0_24 = arith.constant 0 : index
    %c0_25 = arith.constant 0 : index
    %44 = vector.load %arg15[%c0_24, %c0_25] : memref<8x128xf32, #tpu.memory_space<vmem>>, vector<8x128xf32>
    tpu.vector_store %arg15[%c0_24, %c0_25], %43 {strides = array<i32>} : memref<8x128xf32, #tpu.memory_space<vmem>>, vector<8x128xf32>,
    %c0_26 = arith.constant 0 : index
    %c0_27 = arith.constant 0 : index
    %45 = vector.load %arg9[%c0_26, %c0_27] : memref<128x16xbf16, #tpu.memory_space<vmem>>, vector<128x16xbf16>
    %46 = arith.truncf %43 : vector<8x128xf32> to vector<8x128xbf16>
    %cst_28 = arith.constant dense<0.000000e+00> : vector<8x16xf32>
    %47 = tpu.matmul %46, %45, %cst_28 {dimension_numbers = #tpu.dot_dimension_numbers<[1], [0], [0], [1], [0, 0, 1, 1], [], []>} : vector<8x128xbf16>, vector<128x16xbf16>, vector<8x16xf32> -> vector<8x16xf32>
    %c0_29 = arith.constant 0 : index
    %c0_30 = arith.constant 0 : index
    %48 = vector.load %arg10[%c0_29, %c0_30] : memref<1x16xf32, #tpu.memory_space<vmem>>, vector<1x16xf32>
    %49 = vector.broadcast %48 : vector<1x16xf32> to vector<8x16xf32>
    %50 = arith.addf %47, %49 : vector<8x16xf32>
    %cst_31 = arith.constant 0.000000e+00 : f32
    %51 = vector.broadcast %cst_31 : f32 to vector<8x16xf32>
    %52 = arith.cmpf ogt, %50, %51 : vector<8x16xf32>
    %cst_32 = arith.constant 0.000000e+00 : f32
    %53 = vector.broadcast %cst_32 : f32 to vector<8x16xf32>
    %54 = arith.minimumf %50, %53 : vector<8x16xf32>
    %55 = math.exp %54 : vector<8x16xf32>
    %cst_33 = arith.constant 1.000000e+00 : f32
    %56 = vector.broadcast %cst_33 : f32 to vector<8x16xf32>
    %57 = arith.subf %55, %56 : vector<8x16xf32>
    %58 = arith.select %52, %50, %57 : vector<8x16xi1>, vector<8x16xf32>
    %c0_34 = arith.constant 0 : index
    %c0_35 = arith.constant 0 : index
    %59 = vector.load %arg11[%c0_34, %c0_35] : memref<16x32xbf16, #tpu.memory_space<vmem>>, vector<16x32xbf16>
    %60 = arith.truncf %58 : vector<8x16xf32> to vector<8x16xbf16>
    %cst_36 = arith.constant dense<0.000000e+00> : vector<8x32xf32>
    %61 = tpu.matmul %60, %59, %cst_36 {dimension_numbers = #tpu.dot_dimension_numbers<[1], [0], [0], [1], [0, 0, 1, 1], [], []>} : vector<8x16xbf16>, vector<16x32xbf16>, vector<8x32xf32> -> vector<8x32xf32>
    %c0_37 = arith.constant 0 : index
    %c0_38 = arith.constant 0 : index
    %62 = vector.load %arg12[%c0_37, %c0_38] : memref<1x32xf32, #tpu.memory_space<vmem>>, vector<1x32xf32>
    %63 = vector.broadcast %62 : vector<1x32xf32> to vector<8x32xf32>
    %64 = arith.addf %61, %63 : vector<8x32xf32>
    %cst_39 = arith.constant 0.000000e+00 : f32
    %65 = vector.broadcast %cst_39 : f32 to vector<8x32xf32>
    %66 = arith.cmpf ogt, %64, %65 : vector<8x32xf32>
    %cst_40 = arith.constant 0.000000e+00 : f32
    %67 = vector.broadcast %cst_40 : f32 to vector<8x32xf32>
    %68 = arith.minimumf %64, %67 : vector<8x32xf32>
    %69 = math.exp %68 : vector<8x32xf32>
    %cst_41 = arith.constant 1.000000e+00 : f32
    %70 = vector.broadcast %cst_41 : f32 to vector<8x32xf32>
    %71 = arith.subf %69, %70 : vector<8x32xf32>
    %72 = arith.select %66, %64, %71 : vector<8x32xi1>, vector<8x32xf32>
    %c0_42 = arith.constant 0 : index
    %c0_43 = arith.constant 0 : index
    %73 = vector.load %arg13[%c0_42, %c0_43] : memref<32x128xbf16, #tpu.memory_space<vmem>>, vector<32x128xbf16>
    %74 = arith.truncf %72 : vector<8x32xf32> to vector<8x32xbf16>
    %cst_44 = arith.constant dense<0.000000e+00> : vector<8x128xf32>
    %75 = tpu.matmul %74, %73, %cst_44 {dimension_numbers = #tpu.dot_dimension_numbers<[1], [0], [0], [1], [0, 0, 1, 1], [], []>} : vector<8x32xbf16>, vector<32x128xbf16>, vector<8x128xf32> -> vector<8x128xf32>
    %c0_45 = arith.constant 0 : index
    %c0_46 = arith.constant 0 : index
    %76 = vector.load %arg14[%c0_45, %c0_46] : memref<1x128xf32, #tpu.memory_space<vmem>>, vector<1x128xf32>
    %77 = vector.broadcast %76 : vector<1x128xf32> to vector<8x128xf32>
    %78 = arith.addf %75, %77 : vector<8x128xf32>
    %79 = vector.extract_strided_slice %78 {offsets = [0, 0], sizes = [8, 64], strides = [1, 1]} : vector<8x128xf32> to vector<8x64xf32>
    %80 = vector.extract_strided_slice %78 {offsets = [0, 64], sizes = [8, 64], strides = [1, 1]} : vector<8x128xf32> to vector<8x64xf32>
    %81 = arith.subf %3, %79 : vector<8x64xf32>
    %cst_47 = arith.constant 0.000000e+00 : f32
    %82 = vector.broadcast %cst_47 : f32 to vector<8x64xf32>
    %83 = arith.subf %82, %80 : vector<8x64xf32>
    %84 = math.exp %83 : vector<8x64xf32>
    %85 = arith.mulf %81, %84 : vector<8x64xf32>
    %cst_48 = arith.constant -1.03972077 : f32
    %86 = vector.broadcast %cst_48 : f32 to vector<8x64xf32>
    %87 = arith.subf %86, %80 : vector<8x64xf32>
    %88 = arith.mulf %85, %85 : vector<8x64xf32>
    %cst_49 = arith.constant 2.000000e+00 : f32
    %89 = vector.broadcast %cst_49 : f32 to vector<8x64xf32>
    %90 = arith.divf %88, %89 : vector<8x64xf32>
    %cst_50 = arith.constant 1.000000e+00 : f32
    %91 = vector.broadcast %cst_50 : f32 to vector<8x64xf32>
    %92 = arith.addf %91, %90 : vector<8x64xf32>
    %93 = math.log %92 : vector<8x64xf32>
    %cst_51 = arith.constant 1.500000e+00 : f32
    %94 = vector.broadcast %cst_51 : f32 to vector<8x64xf32>
    %95 = arith.mulf %94, %93 : vector<8x64xf32>
    %96 = arith.subf %87, %95 : vector<8x64xf32>
    %cst_52 = arith.constant dense<0.000000e+00> : vector<8xf32>
    %97 = vector.multi_reduction <add>, %96, %cst_52 [1] : vector<8x64xf32> to vector<8xf32>
    %98 = vector.shape_cast %97 : vector<8xf32> to vector<8x1xf32>
    %99 = arith.mulf %38, %38 : vector<8x128xf32>
    %cst_53 = arith.constant 2.000000e+00 : f32
    %100 = vector.broadcast %cst_53 : f32 to vector<8x128xf32>
    %101 = arith.mulf %100, %39 : vector<8x128xf32>
    %102 = math.exp %101 : vector<8x128xf32>
    %103 = arith.addf %99, %102 : vector<8x128xf32>
    %cst_54 = arith.constant 2.000000e+00 : f32
    %104 = vector.broadcast %cst_54 : f32 to vector<8x128xf32>
    %105 = arith.mulf %104, %39 : vector<8x128xf32>
    %106 = arith.subf %103, %105 : vector<8x128xf32>
    %cst_55 = arith.constant 1.000000e+00 : f32
    %107 = vector.broadcast %cst_55 : f32 to vector<8x128xf32>
    %108 = arith.subf %106, %107 : vector<8x128xf32>
    %cst_56 = arith.constant dense<0.000000e+00> : vector<8xf32>
    %109 = vector.multi_reduction <add>, %108, %cst_56 [1] : vector<8x128xf32> to vector<8xf32>
    %110 = vector.shape_cast %109 : vector<8xf32> to vector<8x1xf32>
    %cst_57 = arith.constant 5.000000e-01 : f32
    %111 = vector.broadcast %cst_57 : f32 to vector<8x1xf32>
    %112 = arith.mulf %111, %110 : vector<8x1xf32>
    %c0_58 = arith.constant 0 : index
    %c0_59 = arith.constant 0 : index
    %113 = vector.load %arg16[%c0_58, %c0_59] : memref<1x1xf32, #tpu.memory_space<vmem>>, vector<1x1xf32>
    %114 = arith.subf %98, %112 : vector<8x1xf32>
    %115 = vector.shape_cast %114 : vector<8x1xf32> to vector<1x8x1xf32>
    %cst_60 = arith.constant dense<0.000000e+00> : vector<1xf32>
    %116 = vector.multi_reduction <add>, %115, %cst_60 [1, 2] : vector<1x8x1xf32> to vector<1xf32>
    %117 = vector.shape_cast %116 : vector<1xf32> to vector<1x1x1xf32>
    %118 = vector.extract %117[0, 0, 0] : f32 from vector<1x1x1xf32>
    %119 = vector.broadcast %118 : f32 to vector<1x1xf32>
    %120 = arith.addf %113, %119 : vector<1x1xf32>
    %c0_61 = arith.constant 0 : index
    %c0_62 = arith.constant 0 : index
    %121 = vector.load %arg16[%c0_61, %c0_62] : memref<1x1xf32, #tpu.memory_space<vmem>>, vector<1x1xf32>
    tpu.vector_store %arg16[%c0_61, %c0_62], %120 {strides = array<i32>} : memref<1x1xf32, #tpu.memory_space<vmem>>, vector<1x1xf32>,
    return
  }
  func.func @transform_0(%arg0: i32) -> (i32, i32) {
    %c0_i32 = arith.constant 0 : i32
    %c0_i32_0 = arith.constant 0 : i32
    return %arg0, %c0_i32 : i32, i32
  }
  func.func @transform_1(%arg0: i32) -> (i32, i32) {
    %c0_i32 = arith.constant 0 : i32
    %c0_i32_0 = arith.constant 0 : i32
    return %arg0, %c0_i32 : i32, i32
  }
  func.func @transform_2(%arg0: i32) -> (i32, i32) {
    %c0_i32 = arith.constant 0 : i32
    %c0_i32_0 = arith.constant 0 : i32
    %c0_i32_1 = arith.constant 0 : i32
    return %c0_i32, %c0_i32_0 : i32, i32
  }
  func.func @transform_3(%arg0: i32) -> (i32, i32) {
    %c0_i32 = arith.constant 0 : i32
    %c0_i32_0 = arith.constant 0 : i32
    %c0_i32_1 = arith.constant 0 : i32
    return %c0_i32, %c0_i32_0 : i32, i32
  }
  func.func @transform_4(%arg0: i32) -> (i32, i32) {
    %c0_i32 = arith.constant 0 : i32
    %c0_i32_0 = arith.constant 0 : i32
    %c0_i32_1 = arith.constant 0 : i32
    return %c0_i32, %c0_i32_0 : i32, i32
  }
  func.func @transform_5(%arg0: i32) -> (i32, i32) {
    %c0_i32 = arith.constant 0 : i32
    %c0_i32_0 = arith.constant 0 : i32
    %c0_i32_1 = arith.constant 0 : i32
    return %c0_i32, %c0_i32_0 : i32, i32
  }
  func.func @transform_6(%arg0: i32) -> (i32, i32) {
    %c0_i32 = arith.constant 0 : i32
    %c0_i32_0 = arith.constant 0 : i32
    %c0_i32_1 = arith.constant 0 : i32
    return %c0_i32, %c0_i32_0 : i32, i32
  }
  func.func @transform_7(%arg0: i32) -> (i32, i32) {
    %c0_i32 = arith.constant 0 : i32
    %c0_i32_0 = arith.constant 0 : i32
    %c0_i32_1 = arith.constant 0 : i32
    return %c0_i32, %c0_i32_0 : i32, i32
  }
  func.func @transform_8(%arg0: i32) -> (i32, i32) {
    %c0_i32 = arith.constant 0 : i32
    %c0_i32_0 = arith.constant 0 : i32
    %c0_i32_1 = arith.constant 0 : i32
    return %c0_i32, %c0_i32_0 : i32, i32
  }
  func.func @transform_9(%arg0: i32) -> (i32, i32) {
    %c0_i32 = arith.constant 0 : i32
    %c0_i32_0 = arith.constant 0 : i32
    %c0_i32_1 = arith.constant 0 : i32
    return %c0_i32, %c0_i32_0 : i32, i32
  }
  func.func @transform_10(%arg0: i32) -> (i32, i32) {
    %c0_i32 = arith.constant 0 : i32
    %c0_i32_0 = arith.constant 0 : i32
    %c0_i32_1 = arith.constant 0 : i32
    return %c0_i32, %c0_i32_0 : i32, i32
  }
  func.func @transform_11(%arg0: i32) -> (i32, i32) {
    %c0_i32 = arith.constant 0 : i32
    %c0_i32_0 = arith.constant 0 : i32
    %c0_i32_1 = arith.constant 0 : i32
    return %c0_i32, %c0_i32_0 : i32, i32
  }
  func.func @transform_12(%arg0: i32) -> (i32, i32) {
    %c0_i32 = arith.constant 0 : i32
    %c0_i32_0 = arith.constant 0 : i32
    %c0_i32_1 = arith.constant 0 : i32
    return %c0_i32, %c0_i32_0 : i32, i32
  }
  func.func @transform_13(%arg0: i32) -> (i32, i32) {
    %c0_i32 = arith.constant 0 : i32
    %c0_i32_0 = arith.constant 0 : i32
    %c0_i32_1 = arith.constant 0 : i32
    return %c0_i32, %c0_i32_0 : i32, i32
  }
  func.func @transform_14(%arg0: i32) -> (i32, i32) {
    %c0_i32 = arith.constant 0 : i32
    %c0_i32_0 = arith.constant 0 : i32
    return %arg0, %c0_i32 : i32, i32
  }
  func.func @transform_15(%arg0: i32) -> (i32, i32) {
    %c0_i32 = arith.constant 0 : i32
    %c0_i32_0 = arith.constant 0 : i32
    %c0_i32_1 = arith.constant 0 : i32
    return %c0_i32, %c0_i32_0 : i32, i32
  }
}

module attributes {stable_mosaic.version = 11 : i64} {
  func.func @_tsne_repel_kernel(%arg0: i32, %arg1: memref<8x64xf32, #tpu.memory_space<vmem>>, %arg2: memref<8x64xf32, #tpu.memory_space<vmem>>, %arg3: memref<1x8xf32, #tpu.memory_space<vmem>>, %arg4: memref<8x128xf32, #tpu.memory_space<vmem>>, %arg5: memref<8x128xf32, #tpu.memory_space<vmem>>, %arg6: memref<1x8xf32, #tpu.memory_space<vmem>>, %arg7: memref<1x1xf32, #tpu.memory_space<vmem>>) attributes {dimension_semantics = [#tpu.dimension_semantics<arbitrary>], iteration_bounds = array<i64: 1>, scalar_prefetch = 0 : i64, scratch_operands = 0 : i64, tpu.core_type = #tpu.core_type<tc>, window_params = [{transform_indices = @transform_0, window_bounds = array<i64: 8, 64>}, {pipeline_mode = #tpu.pipeline_mode<synchronous>, transform_indices = @transform_1, window_bounds = array<i64: 8, 64>}, {pipeline_mode = #tpu.pipeline_mode<synchronous>, transform_indices = @transform_2, window_bounds = array<i64: 1, 8>}, {transform_indices = @transform_3, window_bounds = array<i64: 8, 128>}, {pipeline_mode = #tpu.pipeline_mode<synchronous>, transform_indices = @transform_4, window_bounds = array<i64: 8, 128>}, {pipeline_mode = #tpu.pipeline_mode<synchronous>, transform_indices = @transform_5, window_bounds = array<i64: 1, 8>}, {pipeline_mode = #tpu.pipeline_mode<synchronous>, transform_indices = @transform_6, window_bounds = array<i64: 1, 1>}]} {
    %c0_i32 = arith.constant 0 : i32
    %0 = arith.cmpi eq, %arg0, %c0_i32 : i32
    %1 = arith.extui %0 : i1 to i32
    %c0_i32_0 = arith.constant 0 : i32
    %2 = arith.cmpi ne, %1, %c0_i32_0 : i32
    scf.if %2 {
      %cst_42 = arith.constant 0.000000e+00 : f32
      %98 = vector.broadcast %cst_42 : f32 to vector<1x1xf32>
      %c0_43 = arith.constant 0 : index
      %c0_44 = arith.constant 0 : index
      %99 = vector.load %arg7[%c0_43, %c0_44] : memref<1x1xf32, #tpu.memory_space<vmem>>, vector<1x1xf32>
      tpu.vector_store %arg7[%c0_43, %c0_44], %98 {strides = array<i32>} : memref<1x1xf32, #tpu.memory_space<vmem>>, vector<1x1xf32>,
    } else {
    }
    %c0 = arith.constant 0 : index
    %c0_1 = arith.constant 0 : index
    %3 = vector.load %arg1[%c0, %c0_1] : memref<8x64xf32, #tpu.memory_space<vmem>>, vector<8x64xf32>
    %c0_2 = arith.constant 0 : index
    %c0_3 = arith.constant 0 : index
    %4 = vector.load %arg2[%c0_2, %c0_3] : memref<8x64xf32, #tpu.memory_space<vmem>>, vector<8x64xf32>
    %5 = arith.mulf %3, %3 : vector<8x64xf32>
    %cst = arith.constant dense<0.000000e+00> : vector<8xf32>
    %6 = vector.multi_reduction <add>, %5, %cst [1] : vector<8x64xf32> to vector<8xf32>
    %7 = vector.shape_cast %6 : vector<8xf32> to vector<8x1xf32>
    %cst_4 = arith.constant dense<0.000000e+00> : vector<8x8xf32>
    %8 = tpu.matmul %3, %4, %cst_4 {dimension_numbers = #tpu.dot_dimension_numbers<[1], [1], [0], [0], [0, 0, 1, 0], [], []>} : vector<8x64xf32>, vector<8x64xf32>, vector<8x8xf32> -> vector<8x8xf32>
    %c0_5 = arith.constant 0 : index
    %c0_6 = arith.constant 0 : index
    %9 = vector.load %arg3[%c0_5, %c0_6] : memref<1x8xf32, #tpu.memory_space<vmem>>, vector<1x8xf32>
    %10 = vector.broadcast %7 : vector<8x1xf32> to vector<8x8xf32>
    %11 = vector.broadcast %9 : vector<1x8xf32> to vector<8x8xf32>
    %12 = arith.addf %10, %11 : vector<8x8xf32>
    %cst_7 = arith.constant 2.000000e+00 : f32
    %13 = vector.broadcast %cst_7 : f32 to vector<8x8xf32>
    %14 = arith.mulf %13, %8 : vector<8x8xf32>
    %15 = arith.subf %12, %14 : vector<8x8xf32>
    %cst_8 = arith.constant 0.000000e+00 : f32
    %16 = vector.broadcast %cst_8 : f32 to vector<8x8xf32>
    %17 = arith.maximumf %15, %16 : vector<8x8xf32>
    %c8_i32 = arith.constant 8 : i32
    %18 = arith.muli %arg0, %c8_i32 : i32
    %19 = tpu.iota {dimensions = array<i32: 0>} : vector<8x8xi32>
    %20 = vector.broadcast %18 : i32 to vector<8x8xi32>
    %21 = arith.addi %20, %19 : vector<8x8xi32>
    %22 = tpu.iota {dimensions = array<i32: 1>} : vector<8x8xi32>
    %23 = arith.cmpi ne, %21, %22 : vector<8x8xi32>
    %24 = arith.extui %23 : vector<8x8xi1> to vector<8x8xi32>
    %25 = arith.sitofp %24 : vector<8x8xi32> to vector<8x8xf32>
    %cst_9 = arith.constant 1.000000e+00 : f32
    %26 = vector.broadcast %cst_9 : f32 to vector<8x1xf32>
    %cst_10 = arith.constant 0xFF800000 : f32
    %27 = vector.broadcast %cst_10 : f32 to vector<8x1xf32>
    %cst_11 = arith.constant 0x7F800000 : f32
    %28 = vector.broadcast %cst_11 : f32 to vector<8x1xf32>
    %c0_i32_12 = arith.constant 0 : i32
    %c50_i32 = arith.constant 50 : i32
    %29 = arith.addi %c0_i32_12, %c50_i32 : i32
    %c1_i32 = arith.constant 1 : i32
    %30:3 = scf.for %arg8 = %c0_i32_12 to %29 step %c1_i32 iter_args(%arg9 = %26, %arg10 = %27, %arg11 = %28) -> (vector<8x1xf32>, vector<8x1xf32>, vector<8x1xf32>)  : i32 {
      %cst_42 = arith.constant 0.000000e+00 : f32
      %98 = vector.broadcast %cst_42 : f32 to vector<8x8xf32>
      %99 = arith.subf %98, %17 : vector<8x8xf32>
      %100 = vector.broadcast %arg9 : vector<8x1xf32> to vector<8x8xf32>
      %101 = arith.mulf %99, %100 : vector<8x8xf32>
      %102 = math.exp %101 : vector<8x8xf32>
      %103 = arith.mulf %102, %25 : vector<8x8xf32>
      %cst_43 = arith.constant dense<0.000000e+00> : vector<8xf32>
      %104 = vector.multi_reduction <add>, %103, %cst_43 [1] : vector<8x8xf32> to vector<8xf32>
      %105 = vector.shape_cast %104 : vector<8xf32> to vector<8x1xf32>
      %cst_44 = arith.constant 9.99999996E-13 : f32
      %106 = vector.broadcast %cst_44 : f32 to vector<8x1xf32>
      %107 = arith.maximumf %105, %106 : vector<8x1xf32>
      %108 = math.log %107 : vector<8x1xf32>
      %109 = arith.mulf %17, %103 : vector<8x8xf32>
      %cst_45 = arith.constant dense<0.000000e+00> : vector<8xf32>
      %110 = vector.multi_reduction <add>, %109, %cst_45 [1] : vector<8x8xf32> to vector<8xf32>
      %111 = vector.shape_cast %110 : vector<8xf32> to vector<8x1xf32>
      %112 = arith.mulf %arg9, %111 : vector<8x1xf32>
      %113 = arith.divf %112, %107 : vector<8x1xf32>
      %114 = arith.addf %108, %113 : vector<8x1xf32>
      %cst_46 = arith.constant 1.09861231 : f32
      %115 = vector.broadcast %cst_46 : f32 to vector<8x1xf32>
      %116 = arith.subf %114, %115 : vector<8x1xf32>
      %cst_47 = arith.constant 0.000000e+00 : f32
      %117 = vector.broadcast %cst_47 : f32 to vector<8x1xf32>
      %118 = arith.cmpf ogt, %116, %117 : vector<8x1xf32>
      %119 = arith.select %118, %arg9, %arg10 : vector<8x1xi1>, vector<8x1xf32>
      %cst_48 = arith.constant 0.000000e+00 : f32
      %120 = vector.broadcast %cst_48 : f32 to vector<8x1xf32>
      %121 = arith.cmpf ogt, %116, %120 : vector<8x1xf32>
      %122 = arith.select %121, %arg11, %arg9 : vector<8x1xi1>, vector<8x1xf32>
      %cst_49 = arith.constant 0x7F800000 : f32
      %123 = vector.broadcast %cst_49 : f32 to vector<8x1xf32>
      %124 = arith.cmpf oeq, %122, %123 : vector<8x1xf32>
      %cst_50 = arith.constant 2.000000e+00 : f32
      %125 = vector.broadcast %cst_50 : f32 to vector<8x1xf32>
      %126 = arith.mulf %arg9, %125 : vector<8x1xf32>
      %127 = arith.addf %arg9, %122 : vector<8x1xf32>
      %cst_51 = arith.constant 5.000000e-01 : f32
      %128 = vector.broadcast %cst_51 : f32 to vector<8x1xf32>
      %129 = arith.mulf %127, %128 : vector<8x1xf32>
      %130 = arith.select %124, %126, %129 : vector<8x1xi1>, vector<8x1xf32>
      %cst_52 = arith.constant 0xFF800000 : f32
      %131 = vector.broadcast %cst_52 : f32 to vector<8x1xf32>
      %132 = arith.cmpf oeq, %119, %131 : vector<8x1xf32>
      %cst_53 = arith.constant 5.000000e-01 : f32
      %133 = vector.broadcast %cst_53 : f32 to vector<8x1xf32>
      %134 = arith.mulf %arg9, %133 : vector<8x1xf32>
      %135 = arith.addf %arg9, %119 : vector<8x1xf32>
      %cst_54 = arith.constant 5.000000e-01 : f32
      %136 = vector.broadcast %cst_54 : f32 to vector<8x1xf32>
      %137 = arith.mulf %135, %136 : vector<8x1xf32>
      %138 = arith.select %132, %134, %137 : vector<8x1xi1>, vector<8x1xf32>
      %cst_55 = arith.constant 0.000000e+00 : f32
      %139 = vector.broadcast %cst_55 : f32 to vector<8x1xf32>
      %140 = arith.cmpf ogt, %116, %139 : vector<8x1xf32>
      %141 = arith.select %140, %130, %138 : vector<8x1xi1>, vector<8x1xf32>
      scf.yield %141, %119, %122 : vector<8x1xf32>, vector<8x1xf32>, vector<8x1xf32>
    }
    %cst_13 = arith.constant 0.000000e+00 : f32
    %31 = vector.broadcast %cst_13 : f32 to vector<8x8xf32>
    %32 = arith.subf %31, %17 : vector<8x8xf32>
    %33 = vector.broadcast %30#0 : vector<8x1xf32> to vector<8x8xf32>
    %34 = arith.mulf %32, %33 : vector<8x8xf32>
    %35 = math.exp %34 : vector<8x8xf32>
    %36 = arith.mulf %35, %25 : vector<8x8xf32>
    %cst_14 = arith.constant dense<0.000000e+00> : vector<8xf32>
    %37 = vector.multi_reduction <add>, %36, %cst_14 [1] : vector<8x8xf32> to vector<8xf32>
    %38 = vector.shape_cast %37 : vector<8xf32> to vector<8x1xf32>
    %cst_15 = arith.constant 9.99999996E-13 : f32
    %39 = vector.broadcast %cst_15 : f32 to vector<8x1xf32>
    %40 = arith.maximumf %38, %39 : vector<8x1xf32>
    %41 = vector.broadcast %40 : vector<8x1xf32> to vector<8x8xf32>
    %42 = arith.divf %36, %41 : vector<8x8xf32>
    %cst_16 = arith.constant 1.250000e-02 : f32
    %43 = vector.broadcast %cst_16 : f32 to vector<8x8xf32>
    %44 = arith.addf %42, %43 : vector<8x8xf32>
    %cst_17 = arith.constant dense<0.000000e+00> : vector<8xf32>
    %45 = vector.multi_reduction <add>, %44, %cst_17 [1] : vector<8x8xf32> to vector<8xf32>
    %46 = vector.shape_cast %45 : vector<8xf32> to vector<8x1xf32>
    %47 = vector.broadcast %46 : vector<8x1xf32> to vector<8x8xf32>
    %48 = arith.divf %44, %47 : vector<8x8xf32>
    %c0_18 = arith.constant 0 : index
    %c0_19 = arith.constant 0 : index
    %49 = vector.load %arg4[%c0_18, %c0_19] : memref<8x128xf32, #tpu.memory_space<vmem>>, vector<8x128xf32>
    %c0_20 = arith.constant 0 : index
    %c0_21 = arith.constant 0 : index
    %50 = vector.load %arg5[%c0_20, %c0_21] : memref<8x128xf32, #tpu.memory_space<vmem>>, vector<8x128xf32>
    %51 = arith.mulf %49, %49 : vector<8x128xf32>
    %cst_22 = arith.constant dense<0.000000e+00> : vector<8xf32>
    %52 = vector.multi_reduction <add>, %51, %cst_22 [1] : vector<8x128xf32> to vector<8xf32>
    %53 = vector.shape_cast %52 : vector<8xf32> to vector<8x1xf32>
    %cst_23 = arith.constant dense<0.000000e+00> : vector<8x8xf32>
    %54 = tpu.matmul %49, %50, %cst_23 {dimension_numbers = #tpu.dot_dimension_numbers<[1], [1], [0], [0], [0, 0, 1, 0], [], []>} : vector<8x128xf32>, vector<8x128xf32>, vector<8x8xf32> -> vector<8x8xf32>
    %c0_24 = arith.constant 0 : index
    %c0_25 = arith.constant 0 : index
    %55 = vector.load %arg6[%c0_24, %c0_25] : memref<1x8xf32, #tpu.memory_space<vmem>>, vector<1x8xf32>
    %56 = vector.broadcast %53 : vector<8x1xf32> to vector<8x8xf32>
    %57 = vector.broadcast %55 : vector<1x8xf32> to vector<8x8xf32>
    %58 = arith.addf %56, %57 : vector<8x8xf32>
    %cst_26 = arith.constant 2.000000e+00 : f32
    %59 = vector.broadcast %cst_26 : f32 to vector<8x8xf32>
    %60 = arith.mulf %59, %54 : vector<8x8xf32>
    %61 = arith.subf %58, %60 : vector<8x8xf32>
    %cst_27 = arith.constant 0.000000e+00 : f32
    %62 = vector.broadcast %cst_27 : f32 to vector<8x8xf32>
    %63 = arith.maximumf %61, %62 : vector<8x8xf32>
    %cst_28 = arith.constant 1.000000e+00 : f32
    %64 = vector.broadcast %cst_28 : f32 to vector<8x8xf32>
    %65 = arith.divf %63, %64 : vector<8x8xf32>
    %cst_29 = arith.constant 1.000000e+00 : f32
    %66 = vector.broadcast %cst_29 : f32 to vector<8x8xf32>
    %67 = arith.addf %66, %65 : vector<8x8xf32>
    %68 = math.log %67 : vector<8x8xf32>
    %cst_30 = arith.constant -1.000000e+00 : f32
    %69 = vector.broadcast %cst_30 : f32 to vector<8x8xf32>
    %70 = arith.mulf %69, %68 : vector<8x8xf32>
    %71 = math.exp %70 : vector<8x8xf32>
    %72 = arith.mulf %48, %70 : vector<8x8xf32>
    %73 = vector.shape_cast %72 : vector<8x8xf32> to vector<1x8x8xf32>
    %cst_31 = arith.constant dense<0.000000e+00> : vector<1xf32>
    %74 = vector.multi_reduction <add>, %73, %cst_31 [1, 2] : vector<1x8x8xf32> to vector<1xf32>
    %75 = vector.shape_cast %74 : vector<1xf32> to vector<1x1x1xf32>
    %76 = vector.extract %75[0, 0, 0] : f32 from vector<1x1x1xf32>
    %77 = vector.broadcast %76 : f32 to vector<1x1xf32>
    %cst_32 = arith.constant 0.000000e+00 : f32
    %78 = vector.broadcast %cst_32 : f32 to vector<1x1xf32>
    %79 = arith.subf %78, %77 : vector<1x1xf32>
    %cst_33 = arith.constant dense<0.000000e+00> : vector<8xf32>
    %80 = vector.multi_reduction <add>, %71, %cst_33 [1] : vector<8x8xf32> to vector<8xf32>
    %81 = vector.shape_cast %80 : vector<8xf32> to vector<8x1xf32>
    %cst_34 = arith.constant 1.000000e+00 : f32
    %82 = vector.broadcast %cst_34 : f32 to vector<8x1xf32>
    %83 = arith.subf %81, %82 : vector<8x1xf32>
    %cst_35 = arith.constant 9.99999996E-13 : f32
    %84 = vector.broadcast %cst_35 : f32 to vector<8x1xf32>
    %85 = arith.maximumf %83, %84 : vector<8x1xf32>
    %86 = math.log %85 : vector<8x1xf32>
    %87 = vector.shape_cast %86 : vector<8x1xf32> to vector<1x8x1xf32>
    %cst_36 = arith.constant dense<0.000000e+00> : vector<1xf32>
    %88 = vector.multi_reduction <add>, %87, %cst_36 [1, 2] : vector<1x8x1xf32> to vector<1xf32>
    %89 = vector.shape_cast %88 : vector<1xf32> to vector<1x1x1xf32>
    %90 = vector.extract %89[0, 0, 0] : f32 from vector<1x1x1xf32>
    %91 = vector.broadcast %90 : f32 to vector<1x1xf32>
    %c0_37 = arith.constant 0 : index
    %c0_38 = arith.constant 0 : index
    %92 = vector.load %arg7[%c0_37, %c0_38] : memref<1x1xf32, #tpu.memory_space<vmem>>, vector<1x1xf32>
    %93 = arith.addf %91, %79 : vector<1x1xf32>
    %cst_39 = arith.constant 8.000000e+00 : f32
    %94 = vector.broadcast %cst_39 : f32 to vector<1x1xf32>
    %95 = arith.divf %93, %94 : vector<1x1xf32>
    %96 = arith.addf %92, %95 : vector<1x1xf32>
    %c0_40 = arith.constant 0 : index
    %c0_41 = arith.constant 0 : index
    %97 = vector.load %arg7[%c0_40, %c0_41] : memref<1x1xf32, #tpu.memory_space<vmem>>, vector<1x1xf32>
    tpu.vector_store %arg7[%c0_40, %c0_41], %96 {strides = array<i32>} : memref<1x1xf32, #tpu.memory_space<vmem>>, vector<1x1xf32>,
    return
  }
  func.func @transform_0(%arg0: i32) -> (i32, i32) {
    %c0_i32 = arith.constant 0 : i32
    %c0_i32_0 = arith.constant 0 : i32
    return %arg0, %c0_i32 : i32, i32
  }
  func.func @transform_1(%arg0: i32) -> (i32, i32) {
    %c0_i32 = arith.constant 0 : i32
    %c0_i32_0 = arith.constant 0 : i32
    %c0_i32_1 = arith.constant 0 : i32
    return %c0_i32, %c0_i32_0 : i32, i32
  }
  func.func @transform_2(%arg0: i32) -> (i32, i32) {
    %c0_i32 = arith.constant 0 : i32
    %c0_i32_0 = arith.constant 0 : i32
    %c0_i32_1 = arith.constant 0 : i32
    return %c0_i32, %c0_i32_0 : i32, i32
  }
  func.func @transform_3(%arg0: i32) -> (i32, i32) {
    %c0_i32 = arith.constant 0 : i32
    %c0_i32_0 = arith.constant 0 : i32
    return %arg0, %c0_i32 : i32, i32
  }
  func.func @transform_4(%arg0: i32) -> (i32, i32) {
    %c0_i32 = arith.constant 0 : i32
    %c0_i32_0 = arith.constant 0 : i32
    %c0_i32_1 = arith.constant 0 : i32
    return %c0_i32, %c0_i32_0 : i32, i32
  }
  func.func @transform_5(%arg0: i32) -> (i32, i32) {
    %c0_i32 = arith.constant 0 : i32
    %c0_i32_0 = arith.constant 0 : i32
    %c0_i32_1 = arith.constant 0 : i32
    return %c0_i32, %c0_i32_0 : i32, i32
  }
  func.func @transform_6(%arg0: i32) -> (i32, i32) {
    %c0_i32 = arith.constant 0 : i32
    %c0_i32_0 = arith.constant 0 : i32
    %c0_i32_1 = arith.constant 0 : i32
    return %c0_i32, %c0_i32_0 : i32, i32
  }
}

</mosaic_0001>

<llo_original>
// kernel: vae_forward.3
$region0: #{vae_forward.3}
  #allocation0 [shape = 'u32[]', space=smem, size = 0x4, offset = 0x4, fixed_abs, tag = 'smem constant byte address 0x4 - core index']
  #allocation1 [shape = 'u32[72,128]{1,0:T(1,128)}', space=vmem, size = 0x9000, scoped, tag = 'internal scratch']
  %s0 = inlined_call_operand.vmem [shape: f32[8,64], index: 0, kind: input, shape index: {}, may-alias: {0,1}]
  %s1 = inlined_call_operand.vmem [shape: f32[8,64], index: 1, kind: input, shape index: {}, may-alias: {0,1}]
  %s2 = inlined_call_operand.vmem [shape: f32[1,8], index: 2, kind: input, shape index: {}]
  %s3 = inlined_call_operand.vmem [shape: f32[8,128], index: 3, kind: input, shape index: {}, may-alias: {3,4}]
  %s4 = inlined_call_operand.vmem [shape: f32[8,128], index: 4, kind: input, shape index: {}, may-alias: {3,4}]
  %s5 = inlined_call_operand.vmem [shape: f32[1,8], index: 5, kind: input, shape index: {}]
  %s6 = inlined_call_operand.hbm [shape: f32[1,1], index: 6, kind: output, shape index: {}]
  %s7 = sld [smem:[#allocation0]]
  $region45: #{vae_forward.3} parent=0
    _
  %s9 = ssub.s32 1, %s7
  %s10 = scalar_select 0, %s9, %s7
  $region1: #{vae_forward.3} parent=0
    #allocation2 [shape = 'u8[512]{0}', space=vmem, size = 0x400, scoped, tag = 'output window, operand 0, single buffered']
    #allocation3 [shape = 's32[1]{0}', space=sflag, size = 0x4, scoped, tag = 'scoped memory for vae_forward.3']
    %11 = vsyncpa [#allocation3], 0
    // Predicated region
    $region2: #{vae_forward.3} parent=1 // pred_check
      _
    $region3: #{vae_forward.3} parent=1 // pred_check_branch
      %13 = sbr.rel (0) target = $region5
    $region4: #{vae_forward.3} parent=1 // pred_region
      _
    $region5: #{vae_forward.3} parent=1 // pred_fallthru
      _
    // Predicated region
    $region6: #{vae_forward.3} parent=1 // pred_check
      _
    $region7: #{vae_forward.3} parent=1 // pred_check_branch
      %15 = sbr.rel (0) target = $region9
    $region8: #{vae_forward.3} parent=1 // pred_region
      _
    $region9: #{vae_forward.3} parent=1 // pred_fallthru
      _
    // Predicated region
    $region10: #{vae_forward.3} parent=1 // pred_check
      _
    $region11: #{vae_forward.3} parent=1 // pred_check_branch
      %17 = sbr.rel (0) target = $region13
    $region12: #{vae_forward.3} parent=1 // pred_region
      _
    $region13: #{vae_forward.3} parent=1 // pred_fallthru
      _
    // Predicated region
    $region14: #{vae_forward.3} parent=1 // pred_check
      _
    $region15: #{vae_forward.3} parent=1 // pred_check_branch
      %19 = sbr.rel (0) target = $region17
    $region16: #{vae_forward.3} parent=1 // pred_region
      _
    $region17: #{vae_forward.3} parent=1 // pred_fallthru
      _
    // Predicated region
    $region18: #{vae_forward.3} parent=1 // pred_check
      _
    $region19: #{vae_forward.3} parent=1 // pred_check_branch
      %21 = sbr.rel (0) target = $region21
    $region20: #{vae_forward.3} parent=1 // pred_region
      _
    $region21: #{vae_forward.3} parent=1 // pred_fallthru
      _
    // Predicated region
    $region22: #{vae_forward.3} parent=1 // pred_check
      _
    $region23: #{vae_forward.3} parent=1 // pred_check_branch
      %23 = sbr.rel (0) target = $region25
    $region24: #{vae_forward.3} parent=1 // pred_region
      _
    $region25: #{vae_forward.3} parent=1 // pred_fallthru
      _
    %p24 = scmp.eq.s32.totalorder 0, 0
    // Predicated region
    $region26: #{vae_forward.3} parent=1 // pred_check
      %p25 = pneg %p24
    $region27: #{vae_forward.3} parent=1 // pred_check_branch
      %27 = sbr.rel (%p25) target = $region29
    $region28: #{vae_forward.3} parent=1 // pred_region
      %vm28 = vcmask 0
      %29 = vst.msk [vmem:[#allocation2] sm:$0x1] %vm28, 0.0
    $region29: #{vae_forward.3} parent=1 // pred_fallthru
      _
    %v30 = vld [vmem:[%s0] sm:$0xff]
    %v31 = vld [vmem:[%s1] sm:$0xff]
    %v32 = vmul.f32 %v30, %v30
    %vm33 = vcmask 523264
    %v34 = vsel %vm33, %v32, 0.0
    %35 = vadd.xlane.f32.xlu0 %v34
    %v36 = vpop.xlane.xlu0 %35
    %v38 = vsel %vm33, %v30, 0
    %v41 = vsel %vm33, %v31, 0
    %43 = vmatpush.xpose.msra.mxu0 0.0
    %44 = vmatpush.xpose.msra.mxu0 0.0
    %45 = vmatpush.xpose.msra.mxu0 0.0
    %46 = vmatpush.xpose.msra.mxu0 0.0
    %47 = vmatpush.xpose.msra.mxu0 0.0
    %48 = vmatpush.xpose.msra.mxu0 0.0
    %49 = vmatpush.xpose.msra.mxu0 0.0
    %50 = vmatpush.xpose.msra.mxu0 0.0
    %51 = vmatpush.xpose.msra.mxu0 0.0
    %52 = vmatpush.xpose.msra.mxu0 0.0
    %53 = vmatpush.xpose.msra.mxu0 0.0
    %54 = vmatpush.xpose.msra.mxu0 0.0
    %55 = vmatpush.xpose.msra.mxu0 0.0
    %56 = vmatpush.xpose.msra.mxu0 0.0
    %57 = vmatpush.xpose.msra.mxu0 0.0
    %58 = vmatpush.xpose.msra.mxu0 %v41
    %59 = vmatmul.f32.gmra.mxu0 %v38
    %v60 = vpop.f32.mrf.mxu0
    %v61 = vadd.f32 0.0, %v60
    %62 = vdwg.mxu0
    %v63 = vld [vmem:[%s2] sm:$0x1]
    %v65 = vperm.slane %v63, 0
    %v67 = vadd.f32 %v36, %v65
    %v68 = vmul.f32 %v61, 2.0
    %v69 = vsub.f32 %v67, %v68
    %v70 = vmax.f32 %v69, 0.0
    %s71 = smul.u32 0, 8
    %v72 = vlaneseq
    %v73 = vshrl.u32 %v72, 7
    %v74 = vstv %s71
    %v75 = vadd.s32 %v74, %v73
    %v76 = vlaneseq
    %v77 = vand.u32 %v76, 127
    %vm78 = vcmp.ne.s32.totalorder %v75, %v77
    %v79 = vsel %vm78, 1, 0
    %v80 = vcvt.s32.f32 %v79
    loop: start=0, step=1, limit=50
    $region30: #{vae_forward.3} parent=1 // loop_pre_header
      _
    $region31: #{vae_forward.3} parent=1 // loop_header
      %s82 = sphi 0, %s86
      %p83 = scmp.ge.s32.totalorder %s82, 50
      %v87 = vphi 1.0, %v137
      %v88 = vphi -inf, %v125
      %v89 = vphi inf, %v126
    $region32: #{vae_forward.3} parent=1 // loop_header_branch
      %85 = sbr.rel (%p83) target = $region36
    $region33: #{vae_forward.3} parent=1 // loop_body
      %v90 = vsub.f32 0.0, %v70
      %v91 = vmul.f32 %v90, %v87
      %v92 = vmul.f32 %v91, 1.442695
      %v93 = vpow.pop %v92
      %v94 = vmul.f32 %v93, %v80
      %vm95 = vcmask 64512
      %v96 = vsel %vm95, %v94, 0.0
      %97 = vadd.xlane.f32.xlu0 %v96
      %v98 = vpop.xlane.xlu0 %97
      %v99 = vmax.f32 %v98, 1e-12
      %v100 = vlog2.pop %v99
      %v101 = vmul.f32 %v100, 0.6931472
      %v102 = vmul.f32 %v70, %v94
      %v103 = vsel %vm95, %v102, 0.0
      %104 = vadd.xlane.f32.xlu0 %v103
      %v105 = vpop.xlane.xlu0 %104
      %v106 = vmul.f32 %v87, %v105
      %v107 = vrcp.pop %v99
      %v108 = vmul.f32 %v99, %v107
      %v109 = vsub.f32 1.0, %v108
      %v110 = vmul.f32 %v107, %v109
      %v111 = vadd.f32 %v107, %v110
      %vm112 = vweird.f32 %v99
      %vm113 = vweird.f32 %v107
      %vm114 = vmor %vm112, %vm113
      %v115 = vsel %vm114, %v107, %v111
      %v116 = vand.u32 2147483647, %v99
      %vm117 = vcmp.eq.f32.partialorder %v116, 8.507059e+37
      %v118 = vand.u32 %v99, 2147483648
      %v119 = vor.u32 1.1754944e-38, %v118
      %v120 = vsel %vm117, %v119, %v115
      %v121 = vmul.f32 %v106, %v120
      %v122 = vadd.f32 %v101, %v121
      %v123 = vsub.f32 %v122, 1.0986123
      %vm124 = vcmp.gt.f32.partialorder %v123, 0.0
      %v125 = vsel %vm124, %v87, %v88
      %v126 = vsel %vm124, %v89, %v87
      %vm127 = vcmp.eq.f32.partialorder %v126, inf
      %v128 = vmul.f32 %v87, 2.0
      %v129 = vadd.f32 %v87, %v126
      %v130 = vmul.f32 %v129, 0.5
      %v131 = vsel %vm127, %v128, %v130
      %vm132 = vcmp.eq.f32.partialorder %v125, -inf
      %v133 = vmul.f32 %v87, 0.5
      %v134 = vadd.f32 %v87, %v125
      %v135 = vmul.f32 %v134, 0.5
      %v136 = vsel %vm132, %v133, %v135
      %v137 = vsel %vm124, %v131, %v136
    $region34: #{vae_forward.3} parent=1 // loop_footer
      %s86 = sadd.s32 1, %s82
    $region35: #{vae_forward.3} parent=1 // loop_footer_branch
      %81 = sbr.rel target = $region31
    $region36: #{vae_forward.3} parent=1 // loop_exit
      _
    %v138 = vsub.f32 0.0, %v70
    %v139 = vmul.f32 %v138, %v87
    %v140 = vmul.f32 %v139, 1.442695
    %v141 = vpow.pop %v140
    %v142 = vmul.f32 %v141, %v80
    %vm143 = vcmask 64512
    %v144 = vsel %vm143, %v142, 0.0
    %145 = vadd.xlane.f32.xlu0 %v144
    %v146 = vpop.xlane.xlu0 %145
    %v147 = vmax.f32 %v146, 1e-12
    %v148 = vrcp.pop %v147
    %v149 = vmul.f32 %v147, %v148
    %v150 = vsub.f32 1.0, %v149
    %v151 = vmul.f32 %v148, %v150
    %v152 = vadd.f32 %v148, %v151
    %vm153 = vweird.f32 %v147
    %vm154 = vweird.f32 %v148
    %vm155 = vmor %vm153, %vm154
    %v156 = vsel %vm155, %v148, %v152
    %v157 = vand.u32 2147483647, %v147
    %vm158 = vcmp.eq.f32.partialorder %v157, 8.507059e+37
    %v159 = vand.u32 %v147, 2147483648
    %v160 = vor.u32 1.1754944e-38, %v159
    %v161 = vsel %vm158, %v160, %v156
    %v162 = vmul.f32 %v142, %v161
    %v163 = vadd.f32 %v162, 0.0125
    %v164 = vsel %vm143, %v163, 0.0
    %165 = vadd.xlane.f32.xlu0 %v164
    %v166 = vpop.xlane.xlu0 %165
    %v167 = vrcp.pop %v166
    %v168 = vmul.f32 %v166, %v167
    %v169 = vsub.f32 1.0, %v168
    %v170 = vmul.f32 %v167, %v169
    %v171 = vadd.f32 %v167, %v170
    %vm172 = vweird.f32 %v166
    %vm173 = vweird.f32 %v167
    %vm174 = vmor %vm172, %vm173
    %v175 = vsel %vm174, %v167, %v171
    %v176 = vand.u32 2147483647, %v166
    %vm177 = vcmp.eq.f32.partialorder %v176, 8.507059e+37
    %v178 = vand.u32 %v166, 2147483648
    %v179 = vor.u32 1.1754944e-38, %v178
    %v180 = vsel %vm177, %v179, %v175
    %v181 = vmul.f32 %v163, %v180
    %v182 = vld [vmem:[%s3] sm:$0xff]
    %v183 = vld [vmem:[%s4] sm:$0xff]
    %v184 = vmul.f32 %v182, %v182
    %185 = vadd.xlane.f32.xlu0 %v184
    %v186 = vpop.xlane.xlu0 %185
    %187 = vmatpush.xpose.msra.mxu0 0.0
    %188 = vmatpush.xpose.msra.mxu0 0.0
    %189 = vmatpush.xpose.msra.mxu0 0.0
    %190 = vmatpush.xpose.msra.mxu0 0.0
    %191 = vmatpush.xpose.msra.mxu0 0.0
    %192 = vmatpush.xpose.msra.mxu0 0.0
    %193 = vmatpush.xpose.msra.mxu0 0.0
    %194 = vmatpush.xpose.msra.mxu0 0.0
    %195 = vmatpush.xpose.msra.mxu0 0.0
    %196 = vmatpush.xpose.msra.mxu0 0.0
    %197 = vmatpush.xpose.msra.mxu0 0.0
    %198 = vmatpush.xpose.msra.mxu0 0.0
    %199 = vmatpush.xpose.msra.mxu0 0.0
    %200 = vmatpush.xpose.msra.mxu0 0.0
    %201 = vmatpush.xpose.msra.mxu0 0.0
    %202 = vmatpush.xpose.msra.mxu0 %v183
    %203 = vmatmul.f32.gmra.mxu0 %v182
    %v204 = vpop.f32.mrf.mxu0
    %v205 = vadd.f32 0.0, %v204
    %206 = vdwg.mxu0
    %v207 = vld [vmem:[%s5] sm:$0x1]
    %v209 = vperm.slane %v207, 0
    %v211 = vadd.f32 %v186, %v209
    %v212 = vmul.f32 %v205, 2.0
    %v213 = vsub.f32 %v211, %v212
    %v214 = vmax.f32 %v213, 0.0
    %v215 = vadd.f32 %v214, 1.0
    %v216 = vlog2.pop %v215
    %v217 = vmul.f32 %v216, 0.6931472
    %v218 = vmul.f32 %v217, -1.0
    %v219 = vmul.f32 %v218, 1.442695
    %v220 = vpow.pop %v219
    %v221 = vmul.f32 %v181, %v218
    %v222 = vsel %vm143, %v221, 0.0
    %223 = vadd.xlane.f32.xlu0 %v222
    %v224 = vpop.xlane.xlu0 %223
    %v225 = vrot.slane %v224, 4
    %v226 = vadd.f32 %v224, %v225
    %v227 = vrot.slane %v226, 2
    %v228 = vadd.f32 %v226, %v227
    %v229 = vrot.slane %v228, 1
    %v230 = vadd.f32 %v228, %v229
    %s231 = vtos %v230
    %v232 = vstv %s231
    %v233 = vsub.f32 0.0, %v232
    %v234 = vsel %vm143, %v220, 0.0
    %235 = vadd.xlane.f32.xlu0 %v234
    %v236 = vpop.xlane.xlu0 %235
    %v237 = vsub.f32 %v236, 1.0
    %v238 = vmax.f32 %v237, 1e-12
    %v239 = vlog2.pop %v238
    %v240 = vmul.f32 %v239, 0.6931472
    %vm241 = vcmask 7168
    %v242 = vsel %vm241, %v240, 0.0
    %243 = vadd.xlane.f32.xlu0 %v242
    %v244 = vpop.xlane.xlu0 %243
    %v245 = vrot.slane %v244, 4
    %v246 = vadd.f32 %v244, %v245
    %v247 = vrot.slane %v246, 2
    %v248 = vadd.f32 %v246, %v247
    %v249 = vrot.slane %v248, 1
    %v250 = vadd.f32 %v248, %v249
    %s251 = vtos %v250
    %v252 = vstv %s251
    %v253 = vld [vmem:[#allocation2] sm:$0x1]
    %v254 = vadd.f32 %v252, %v233
    %v255 = vrcp.pop 8.0
    %v256 = vmul.f32 8.0, %v255
    %v257 = vsub.f32 1.0, %v256
    %v258 = vmul.f32 %v255, %v257
    %v259 = vadd.f32 %v255, %v258
    %vm260 = vweird.f32 %v255
    %v261 = vsel %vm260, %v255, %v259
    %v262 = vmul.f32 %v254, %v261
    %v263 = vadd.f32 %v253, %v262
    %vm264 = vcmask 0
    %265 = vst.msk [vmem:[#allocation2] sm:$0x1] %vm264, %v263
    // Predicated region
    $region37: #{vae_forward.3} parent=1 // pred_check
      _
    $region38: #{vae_forward.3} parent=1 // pred_check_branch
      %267 = sbr.rel (0) target = $region40
    $region39: #{vae_forward.3} parent=1 // pred_region
      %269 = vsyncadd [#allocation3], 0
      %s271 = sshll.u32 [#allocation2], 4
      %s272 = int_to_ptr.vmem [resolvable:$true] %s271
      %s273 = sshll.u32 %s6, 4
      %s274 = int_to_ptr.hbm [resolvable:$true] %s273
      %276 = dma.vmem_to_hbm [thread:$0]  %s272, 16, %s274, [#allocation3]
    $region40: #{vae_forward.3} parent=1 // pred_fallthru
      _
    // Predicated region
    $region41: #{vae_forward.3} parent=1 // pred_check
      _
    $region42: #{vae_forward.3} parent=1 // pred_check_branch
      %278 = sbr.rel (0) target = $region44
    $region43: #{vae_forward.3} parent=1 // pred_region
      %280 = dma.done [#allocation3], 16
    $region44: #{vae_forward.3} parent=1 // pred_fallthru
      _
    %281 = vsyncpa [#allocation3], 1

// kernel: vae_forward.2
$region0: #{vae_forward.2}
  #allocation0 [shape = 'u32[]', space=smem, size = 0x4, offset = 0x4, fixed_abs, tag = 'smem constant byte address 0x4 - core index']
  #allocation1 [shape = 'u32[72,128]{1,0:T(1,128)}', space=vmem, size = 0x9000, scoped, tag = 'internal scratch']
  %s0 = inlined_call_operand.vmem [shape: f32[8,64], index: 0, kind: input, shape index: {}]
  %s1 = inlined_call_operand.vmem [shape: f32[8,128], index: 1, kind: input, shape index: {}]
  %s2 = inlined_call_operand.vmem [shape: bf16[64,32], index: 2, kind: input, shape index: {}]
  %s3 = inlined_call_operand.vmem [shape: f32[1,32], index: 3, kind: input, shape index: {}]
  %s4 = inlined_call_operand.vmem [shape: bf16[32,16], index: 4, kind: input, shape index: {}]
  %s5 = inlined_call_operand.vmem [shape: f32[1,16], index: 5, kind: input, shape index: {}]
  %s6 = inlined_call_operand.vmem [shape: bf16[16,256], index: 6, kind: input, shape index: {}]
  %s7 = inlined_call_operand.vmem [shape: f32[1,256], index: 7, kind: input, shape index: {}]
  %s8 = inlined_call_operand.vmem [shape: bf16[128,16], index: 8, kind: input, shape index: {}]
  %s9 = inlined_call_operand.vmem [shape: f32[1,16], index: 9, kind: input, shape index: {}]
  %s10 = inlined_call_operand.vmem [shape: bf16[16,32], index: 10, kind: input, shape index: {}]
  %s11 = inlined_call_operand.vmem [shape: f32[1,32], index: 11, kind: input, shape index: {}]
  %s12 = inlined_call_operand.vmem [shape: bf16[32,128], index: 12, kind: input, shape index: {}]
  %s13 = inlined_call_operand.vmem [shape: f32[1,128], index: 13, kind: input, shape index: {}]
  %s14 = inlined_call_operand.vmem [shape: f32[8,128], index: 14, kind: output, shape index: {0}]
  %s15 = inlined_call_operand.hbm [shape: f32[1,1], index: 15, kind: output, shape index: {1}]
  %16 = xla_tuple %s14, %s15
  %s17 = sld [smem:[#allocation0]]
  $region78: #{vae_forward.2} parent=0
    _
  %s19 = ssub.s32 1, %s17
  %s20 = scalar_select 0, %s19, %s17
  $region1: #{vae_forward.2} parent=0
    #allocation2 [shape = 'u8[512]{0}', space=vmem, size = 0x400, scoped, tag = 'output window, operand 1, single buffered']
    #allocation3 [shape = 's32[1]{0}', space=sflag, size = 0x4, scoped, tag = 'scoped memory for vae_forward.2']
    %21 = vsyncpa [#allocation3], 0
    // Predicated region
    $region2: #{vae_forward.2} parent=1 // pred_check
      _
    $region3: #{vae_forward.2} parent=1 // pred_check_branch
      %23 = sbr.rel (0) target = $region5
    $region4: #{vae_forward.2} parent=1 // pred_region
      _
    $region5: #{vae_forward.2} parent=1 // pred_fallthru
      _
    // Predicated region
    $region6: #{vae_forward.2} parent=1 // pred_check
      _
    $region7: #{vae_forward.2} parent=1 // pred_check_branch
      %25 = sbr.rel (0) target = $region9
    $region8: #{vae_forward.2} parent=1 // pred_region
      _
    $region9: #{vae_forward.2} parent=1 // pred_fallthru
      _
    // Predicated region
    $region10: #{vae_forward.2} parent=1 // pred_check
      _
    $region11: #{vae_forward.2} parent=1 // pred_check_branch
      %27 = sbr.rel (0) target = $region13
    $region12: #{vae_forward.2} parent=1 // pred_region
      _
    $region13: #{vae_forward.2} parent=1 // pred_fallthru
      _
    // Predicated region
    $region14: #{vae_forward.2} parent=1 // pred_check
      _
    $region15: #{vae_forward.2} parent=1 // pred_check_branch
      %29 = sbr.rel (0) target = $region17
    $region16: #{vae_forward.2} parent=1 // pred_region
      _
    $region17: #{vae_forward.2} parent=1 // pred_fallthru
      _
    // Predicated region
    $region18: #{vae_forward.2} parent=1 // pred_check
      _
    $region19: #{vae_forward.2} parent=1 // pred_check_branch
      %31 = sbr.rel (0) target = $region21
    $region20: #{vae_forward.2} parent=1 // pred_region
      _
    $region21: #{vae_forward.2} parent=1 // pred_fallthru
      _
    // Predicated region
    $region22: #{vae_forward.2} parent=1 // pred_check
      _
    $region23: #{vae_forward.2} parent=1 // pred_check_branch
      %33 = sbr.rel (0) target = $region25
    $region24: #{vae_forward.2} parent=1 // pred_region
      _
    $region25: #{vae_forward.2} parent=1 // pred_fallthru
      _
    // Predicated region
    $region26: #{vae_forward.2} parent=1 // pred_check
      _
    $region27: #{vae_forward.2} parent=1 // pred_check_branch
      %35 = sbr.rel (0) target = $region29
    $region28: #{vae_forward.2} parent=1 // pred_region
      _
    $region29: #{vae_forward.2} parent=1 // pred_fallthru
      _
    // Predicated region
    $region30: #{vae_forward.2} parent=1 // pred_check
      _
    $region31: #{vae_forward.2} parent=1 // pred_check_branch
      %37 = sbr.rel (0) target = $region33
    $region32: #{vae_forward.2} parent=1 // pred_region
      _
    $region33: #{vae_forward.2} parent=1 // pred_fallthru
      _
    // Predicated region
    $region34: #{vae_forward.2} parent=1 // pred_check
      _
    $region35: #{vae_forward.2} parent=1 // pred_check_branch
      %39 = sbr.rel (0) target = $region37
    $region36: #{vae_forward.2} parent=1 // pred_region
      _
    $region37: #{vae_forward.2} parent=1 // pred_fallthru
      _
    // Predicated region
    $region38: #{vae_forward.2} parent=1 // pred_check
      _
    $region39: #{vae_forward.2} parent=1 // pred_check_branch
      %41 = sbr.rel (0) target = $region41
    $region40: #{vae_forward.2} parent=1 // pred_region
      _
    $region41: #{vae_forward.2} parent=1 // pred_fallthru
      _
    // Predicated region
    $region42: #{vae_forward.2} parent=1 // pred_check
      _
    $region43: #{vae_forward.2} parent=1 // pred_check_branch
      %43 = sbr.rel (0) target = $region45
    $region44: #{vae_forward.2} parent=1 // pred_region
      _
    $region45: #{vae_forward.2} parent=1 // pred_fallthru
      _
    // Predicated region
    $region46: #{vae_forward.2} parent=1 // pred_check
      _
    $region47: #{vae_forward.2} parent=1 // pred_check_branch
      %45 = sbr.rel (0) target = $region49
    $region48: #{vae_forward.2} parent=1 // pred_region
      _
    $region49: #{vae_forward.2} parent=1 // pred_fallthru
      _
    // Predicated region
    $region50: #{vae_forward.2} parent=1 // pred_check
      _
    $region51: #{vae_forward.2} parent=1 // pred_check_branch
      %47 = sbr.rel (0) target = $region53
    $region52: #{vae_forward.2} parent=1 // pred_region
      _
    $region53: #{vae_forward.2} parent=1 // pred_fallthru
      _
    // Predicated region
    $region54: #{vae_forward.2} parent=1 // pred_check
      _
    $region55: #{vae_forward.2} parent=1 // pred_check_branch
      %49 = sbr.rel (0) target = $region57
    $region56: #{vae_forward.2} parent=1 // pred_region
      _
    $region57: #{vae_forward.2} parent=1 // pred_fallthru
      _
    %p51 = scmp.eq.s32.totalorder 0, 0
    // Predicated region
    $region58: #{vae_forward.2} parent=1 // pred_check
      %p52 = pneg %p51
    $region59: #{vae_forward.2} parent=1 // pred_check_branch
      %54 = sbr.rel (%p52) target = $region61
    $region60: #{vae_forward.2} parent=1 // pred_region
      %vm55 = vcmask 0
      %56 = vst.msk [vmem:[#allocation2] sm:$0x1] %vm55, 0.0
    $region61: #{vae_forward.2} parent=1 // pred_fallthru
      _
    %v57 = vld [vmem:[%s0] sm:$0xff]
    %v58 = vld [vmem:[%s2] sm:$0xf]
    %v59 = vld [vmem:[%s2 + $0x4] sm:$0xf]
    %v60 = vld [vmem:[%s2 + $0x8] sm:$0xf]
    %v61 = vld [vmem:[%s2 + $0xc] sm:$0xf]
    %v62 = vld [vmem:[%s2 + $0x10] sm:$0xf]
    %v63 = vld [vmem:[%s2 + $0x14] sm:$0xf]
    %v64 = vld [vmem:[%s2 + $0x18] sm:$0xf]
    %v65 = vld [vmem:[%s2 + $0x1c] sm:$0xf]
    %v66 = vpack.c.bf16 %v57, %v57
    %v67 = vld [vmem:[%s3] sm:$0x1]
    %v69 = vperm.slane %v67, 0
    %v79 = vunpack.c.l.b16 %v58
    %v80 = vunpack.c.l.b16 %v59
    %v81 = vunpack.c.l.b16 %v60
    %v82 = vunpack.c.l.b16 %v61
    %v83 = vunpack.c.l.b16 %v62
    %v84 = vunpack.c.l.b16 %v63
    %v85 = vunpack.c.l.b16 %v64
    %v86 = vunpack.c.l.b16 %v65
    %v87 = vpack.c.b16 %v80, %v79
    %v88 = vpack.c.b16 %v82, %v81
    %v89 = vpack.c.b16 %v84, %v83
    %v90 = vpack.c.b16 %v86, %v85
    %vm95 = vcmask 523264
    %v97 = vsel %vm95, %v66, 0
    %99 = vmatpush.bf16.msra.mxu0 0
    %100 = vmatpush.bf16.msra.mxu0 0
    %101 = vmatpush.bf16.msra.mxu0 0
    %102 = vmatpush.bf16.msra.mxu0 0
    %103 = vmatpush.bf16.msra.mxu0 %v90
    %104 = vmatpush.bf16.msra.mxu0 %v89
    %105 = vmatpush.bf16.msra.mxu0 %v88
    %106 = vmatpush.bf16.msra.mxu0 %v87
    %107 = vmatmul.bf16.gmra.mxu0 %v97
    %v108 = vpop.f32.mrf.mxu0
    %v109 = vadd.f32 %v69, %v108
    %v110 = vpop.f32.mrf.mxu0
    %111 = vdwg.mxu0
    %vm112 = vcmp.gt.f32.partialorder %v109, 0.0
    %v113 = vmin.f32 %v109, 0.0
    %v114 = vmul.f32 %v113, 1.442695
    %v115 = vpow.pop %v114
    %v116 = vsub.f32 %v115, 1.0
    %v117 = vsel %vm112, %v109, %v116
    %v118 = vld [vmem:[%s4] sm:$0xf]
    %v119 = vld [vmem:[%s4 + $0x4] sm:$0xf]
    %v120 = vld [vmem:[%s4 + $0x8] sm:$0xf]
    %v121 = vld [vmem:[%s4 + $0xc] sm:$0xf]
    %v122 = vpack.c.bf16 %v117, %v117
    %v123 = vld [vmem:[%s5] sm:$0x1]
    %v125 = vperm.slane %v123, 0
    %v131 = vunpack.c.l.b16 %v118
    %v132 = vunpack.c.l.b16 %v119
    %v133 = vunpack.c.l.b16 %v120
    %v134 = vunpack.c.l.b16 %v121
    %v135 = vpack.c.b16 %v132, %v131
    %v136 = vpack.c.b16 %v134, %v133
    %vm139 = vcmask 261120
    %v141 = vsel %vm139, %v122, 0
    %143 = vmatpush.bf16.msra.mxu0 0
    %144 = vmatpush.bf16.msra.mxu0 0
    %145 = vmatpush.bf16.msra.mxu0 0
    %146 = vmatpush.bf16.msra.mxu0 0
    %147 = vmatpush.bf16.msra.mxu0 0
    %148 = vmatpush.bf16.msra.mxu0 0
    %149 = vmatpush.bf16.msra.mxu0 %v136
    %150 = vmatpush.bf16.msra.mxu0 %v135
    %151 = vmatmul.bf16.gmra.mxu0 %v141
    %v152 = vpop.f32.mrf.mxu0
    %v153 = vadd.f32 %v125, %v152
    %v154 = vpop.f32.mrf.mxu0
    %155 = vdwg.mxu0
    %vm156 = vcmp.gt.f32.partialorder %v153, 0.0
    %v157 = vmin.f32 %v153, 0.0
    %v158 = vmul.f32 %v157, 1.442695
    %v159 = vpow.pop %v158
    %v160 = vsub.f32 %v159, 1.0
    %v161 = vsel %vm156, %v153, %v160
    %v162 = vld [vmem:[%s6] sm:$0xff]
    %v163 = vld [vmem:[%s6 + $0x8] sm:$0xff]
    %v164 = vpack.c.bf16 %v161, %v161
    %v165 = vld [vmem:[%s7] sm:$0x3]
    %v167 = vperm.slane %v165, 0
    %v168 = vperm.slane %v165, 1
    %v173 = vunpack.c.l.b16 %v162
    %v174 = vunpack.c.h.b16 %v162
    %v175 = vunpack.c.l.b16 %v163
    %v176 = vunpack.c.h.b16 %v163
    %v177 = vpack.c.b16 %v175, %v173
    %v178 = vpack.c.b16 %v176, %v174
    %vm181 = vcmask 130048
    %v183 = vsel %vm181, %v164, 0
    %185 = vmatpush.bf16.msra.mxu0 0
    %186 = vmatpush.bf16.msra.mxu0 0
    %187 = vmatpush.bf16.msra.mxu0 0
    %188 = vmatpush.bf16.msra.mxu0 0
    %189 = vmatpush.bf16.msra.mxu0 0
    %190 = vmatpush.bf16.msra.mxu0 0
    %191 = vmatpush.bf16.msra.mxu0 0
    %192 = vmatpush.bf16.msra.mxu0 %v177
    %193 = vmatmul.bf16.gmra.mxu0 %v183
    %v194 = vpop.f32.mrf.mxu0
    %v195 = vadd.f32 %v167, %v194
    %v196 = vpop.f32.mrf.mxu0
    %197 = vdwg.mxu0
    %198 = vmatpush.bf16.msra.mxu0 0
    %199 = vmatpush.bf16.msra.mxu0 0
    %200 = vmatpush.bf16.msra.mxu0 0
    %201 = vmatpush.bf16.msra.mxu0 0
    %202 = vmatpush.bf16.msra.mxu0 0
    %203 = vmatpush.bf16.msra.mxu0 0
    %204 = vmatpush.bf16.msra.mxu0 0
    %205 = vmatpush.bf16.msra.mxu0 %v178
    %206 = vmatmul.bf16.gmra.mxu0 %v183
    %v207 = vpop.f32.mrf.mxu0
    %v208 = vadd.f32 %v168, %v207
    %v209 = vpop.f32.mrf.mxu0
    %210 = vdwg.mxu0
    %v211 = vmul.f32 %v208, 1.442695
    %v212 = vpow.pop %v211
    %v213 = vld [vmem:[%s1] sm:$0xff]
    %v214 = vmul.f32 %v212, %v213
    %v215 = vadd.f32 %v195, %v214
    %216 = vst [vmem:[%s14] sm:$0xff] %v215
    %v217 = vld [vmem:[%s8] sm:$0xf]
    %v218 = vld [vmem:[%s8 + $0x4] sm:$0xf]
    %v219 = vld [vmem:[%s8 + $0x8] sm:$0xf]
    %v220 = vld [vmem:[%s8 + $0xc] sm:$0xf]
    %v221 = vld [vmem:[%s8 + $0x10] sm:$0xf]
    %v222 = vld [vmem:[%s8 + $0x14] sm:$0xf]
    %v223 = vld [vmem:[%s8 + $0x18] sm:$0xf]
    %v224 = vld [vmem:[%s8 + $0x1c] sm:$0xf]
    %v225 = vld [vmem:[%s8 + $0x20] sm:$0xf]
    %v226 = vld [vmem:[%s8 + $0x24] sm:$0xf]
    %v227 = vld [vmem:[%s8 + $0x28] sm:$0xf]
    %v228 = vld [vmem:[%s8 + $0x2c] sm:$0xf]
    %v229 = vld [vmem:[%s8 + $0x30] sm:$0xf]
    %v230 = vld [vmem:[%s8 + $0x34] sm:$0xf]
    %v231 = vld [vmem:[%s8 + $0x38] sm:$0xf]
    %v232 = vld [vmem:[%s8 + $0x3c] sm:$0xf]
    %v233 = vpack.c.bf16 %v215, %v215
    %v234 = vld [vmem:[%s9] sm:$0x1]
    %v236 = vperm.slane %v234, 0
    %v254 = vunpack.c.l.b16 %v217
    %v255 = vunpack.c.l.b16 %v218
    %v256 = vunpack.c.l.b16 %v219
    %v257 = vunpack.c.l.b16 %v220
    %v258 = vunpack.c.l.b16 %v221
    %v259 = vunpack.c.l.b16 %v222
    %v260 = vunpack.c.l.b16 %v223
    %v261 = vunpack.c.l.b16 %v224
    %v262 = vunpack.c.l.b16 %v225
    %v263 = vunpack.c.l.b16 %v226
    %v264 = vunpack.c.l.b16 %v227
    %v265 = vunpack.c.l.b16 %v228
    %v266 = vunpack.c.l.b16 %v229
    %v267 = vunpack.c.l.b16 %v230
    %v268 = vunpack.c.l.b16 %v231
    %v269 = vunpack.c.l.b16 %v232
    %v270 = vpack.c.b16 %v255, %v254
    %v271 = vpack.c.b16 %v257, %v256
    %v272 = vpack.c.b16 %v259, %v258
    %v273 = vpack.c.b16 %v261, %v260
    %v274 = vpack.c.b16 %v263, %v262
    %v275 = vpack.c.b16 %v265, %v264
    %v276 = vpack.c.b16 %v267, %v266
    %v277 = vpack.c.b16 %v269, %v268
    %286 = vmatpush.bf16.msra.mxu0 %v277
    %287 = vmatpush.bf16.msra.mxu0 %v276
    %288 = vmatpush.bf16.msra.mxu0 %v275
    %289 = vmatpush.bf16.msra.mxu0 %v274
    %290 = vmatpush.bf16.msra.mxu0 %v273
    %291 = vmatpush.bf16.msra.mxu0 %v272
    %292 = vmatpush.bf16.msra.mxu0 %v271
    %293 = vmatpush.bf16.msra.mxu0 %v270
    %294 = vmatmul.bf16.gmra.mxu0 %v233
    %v295 = vpop.f32.mrf.mxu0
    %v296 = vadd.f32 %v236, %v295
    %v297 = vpop.f32.mrf.mxu0
    %298 = vdwg.mxu0
    %vm299 = vcmp.gt.f32.partialorder %v296, 0.0
    %v300 = vmin.f32 %v296, 0.0
    %v301 = vmul.f32 %v300, 1.442695
    %v302 = vpow.pop %v301
    %v303 = vsub.f32 %v302, 1.0
    %v304 = vsel %vm299, %v296, %v303
    %v305 = vld [vmem:[%s10] sm:$0xf]
    %v306 = vld [vmem:[%s10 + $0x4] sm:$0xf]
    %v307 = vpack.c.bf16 %v304, %v304
    %v308 = vld [vmem:[%s11] sm:$0x1]
    %v310 = vperm.slane %v308, 0
    %v314 = vunpack.c.l.b16 %v305
    %v315 = vunpack.c.l.b16 %v306
    %v316 = vpack.c.b16 %v315, %v314
    %v319 = vsel %vm181, %v307, 0
    %321 = vmatpush.bf16.msra.mxu0 0
    %322 = vmatpush.bf16.msra.mxu0 0
    %323 = vmatpush.bf16.msra.mxu0 0
    %324 = vmatpush.bf16.msra.mxu0 0
    %325 = vmatpush.bf16.msra.mxu0 0
    %326 = vmatpush.bf16.msra.mxu0 0
    %327 = vmatpush.bf16.msra.mxu0 0
    %328 = vmatpush.bf16.msra.mxu0 %v316
    %329 = vmatmul.bf16.gmra.mxu0 %v319
    %v330 = vpop.f32.mrf.mxu0
    %v331 = vadd.f32 %v310, %v330
    %v332 = vpop.f32.mrf.mxu0
    %333 = vdwg.mxu0
    %vm334 = vcmp.gt.f32.partialorder %v331, 0.0
    %v335 = vmin.f32 %v331, 0.0
    %v336 = vmul.f32 %v335, 1.442695
    %v337 = vpow.pop %v336
    %v338 = vsub.f32 %v337, 1.0
    %v339 = vsel %vm334, %v331, %v338
    %v340 = vld [vmem:[%s12] sm:$0xf]
    %v341 = vld [vmem:[%s12 + $0x4] sm:$0xf]
    %v342 = vld [vmem:[%s12 + $0x8] sm:$0xf]
    %v343 = vld [vmem:[%s12 + $0xc] sm:$0xf]
    %v344 = vpack.c.bf16 %v339, %v339
    %v345 = vld [vmem:[%s13] sm:$0x1]
    %v347 = vperm.slane %v345, 0
    %v353 = vunpack.c.l.b16 %v340
    %v354 = vunpack.c.l.b16 %v341
    %v355 = vunpack.c.l.b16 %v342
    %v356 = vunpack.c.l.b16 %v343
    %v357 = vpack.c.b16 %v354, %v353
    %v358 = vpack.c.b16 %v356, %v355
    %v362 = vsel %vm139, %v344, 0
    %364 = vmatpush.bf16.msra.mxu0 0
    %365 = vmatpush.bf16.msra.mxu0 0
    %366 = vmatpush.bf16.msra.mxu0 0
    %367 = vmatpush.bf16.msra.mxu0 0
    %368 = vmatpush.bf16.msra.mxu0 0
    %369 = vmatpush.bf16.msra.mxu0 0
    %370 = vmatpush.bf16.msra.mxu0 %v358
    %371 = vmatpush.bf16.msra.mxu0 %v357
    %372 = vmatmul.bf16.gmra.mxu0 %v362
    %v373 = vpop.f32.mrf.mxu0
    %v374 = vadd.f32 %v347, %v373
    %v375 = vpop.f32.mrf.mxu0
    %376 = vdwg.mxu0
    %v377 = vsub.f32 %v57, %v374
    %v378 = vsub.f32 0.0, %v374
    %v379 = vmul.f32 %v378, 1.442695
    %v380 = vpow.pop %v379
    %382 = vrot.lane.b32.xlu0 %v380, 64
    %v383 = vpop.permute.xlu0 %382
    %v385 = vmul.f32 %v377, %v383
    %v386 = vsub.f32 -1.0397208, %v374
    %v387 = vmul.f32 %v385, %v385
    %v388 = vrcp.pop 2.0
    %v389 = vmul.f32 2.0, %v388
    %v390 = vsub.f32 1.0, %v389
    %v391 = vmul.f32 %v388, %v390
    %v392 = vadd.f32 %v388, %v391
    %vm393 = vweird.f32 %v388
    %v394 = vsel %vm393, %v388, %v392
    %v395 = vmul.f32 %v387, %v394
    %v396 = vadd.f32 %v395, 1.0
    %v397 = vlog2.pop %v396
    %v398 = vmul.f32 %v397, 0.6931472
    %v399 = vmul.f32 %v398, 1.5
    %401 = vrot.lane.b32.xlu0 %v399, 64
    %v402 = vpop.permute.xlu0 %401
    %v404 = vsub.f32 %v386, %v402
    %406 = vrot.lane.b32.xlu0 %v404, 64
    %v407 = vpop.permute.xlu0 %406
    %v409 = vsel %vm95, %v407, 0.0
    %410 = vadd.xlane.f32.xlu0 %v409
    %v411 = vpop.xlane.xlu0 %410
    %v412 = vmul.f32 %v195, %v195
    %v413 = vmul.f32 %v208, 2.0
    %v414 = vmul.f32 %v413, 1.442695
    %v415 = vpow.pop %v414
    %v416 = vadd.f32 %v412, %v415
    %v417 = vsub.f32 %v416, %v413
    %v418 = vsub.f32 %v417, 1.0
    %419 = vadd.xlane.f32.xlu0 %v418
    %v420 = vpop.xlane.xlu0 %419
    %v421 = vmul.f32 %v420, 0.5
    %v422 = vld [vmem:[#allocation2] sm:$0x1]
    %v423 = vsub.f32 %v411, %v421
    %vm424 = vcmask 7168
    %v425 = vsel %vm424, %v423, 0.0
    %426 = vadd.xlane.f32.xlu0 %v425
    %v427 = vpop.xlane.xlu0 %426
    %v428 = vrot.slane %v427, 4
    %v429 = vadd.f32 %v427, %v428
    %v430 = vrot.slane %v429, 2
    %v431 = vadd.f32 %v429, %v430
    %v432 = vrot.slane %v431, 1
    %v433 = vadd.f32 %v431, %v432
    %s434 = vtos %v433
    %v435 = vstv %s434
    %v436 = vadd.f32 %v422, %v435
    %vm437 = vcmask 0
    %438 = vst.msk [vmem:[#allocation2] sm:$0x1] %vm437, %v436
    // Predicated region
    $region62: #{vae_forward.2} parent=1 // pred_check
      _
    $region63: #{vae_forward.2} parent=1 // pred_check_branch
      %440 = sbr.rel (0) target = $region65
    $region64: #{vae_forward.2} parent=1 // pred_region
      _
    $region65: #{vae_forward.2} parent=1 // pred_fallthru
      _
    // Predicated region
    $region66: #{vae_forward.2} parent=1 // pred_check
      _
    $region67: #{vae_forward.2} parent=1 // pred_check_branch
      %442 = sbr.rel (0) target = $region69
    $region68: #{vae_forward.2} parent=1 // pred_region
      %444 = vsyncadd [#allocation3], 0
      %s446 = sshll.u32 [#allocation2], 4
      %s447 = int_to_ptr.vmem [resolvable:$true] %s446
      %s448 = sshll.u32 %s15, 4
      %s449 = int_to_ptr.hbm [resolvable:$true] %s448
      %451 = dma.vmem_to_hbm [thread:$0]  %s447, 16, %s449, [#allocation3]
    $region69: #{vae_forward.2} parent=1 // pred_fallthru
      _
    // Predicated region
    $region70: #{vae_forward.2} parent=1 // pred_check
      _
    $region71: #{vae_forward.2} parent=1 // pred_check_branch
      %453 = sbr.rel (0) target = $region73
    $region72: #{vae_forward.2} parent=1 // pred_region
      _
    $region73: #{vae_forward.2} parent=1 // pred_fallthru
      _
    // Predicated region
    $region74: #{vae_forward.2} parent=1 // pred_check
      _
    $region75: #{vae_forward.2} parent=1 // pred_check_branch
      %455 = sbr.rel (0) target = $region77
    $region76: #{vae_forward.2} parent=1 // pred_region
      %457 = dma.done [#allocation3], 16
    $region77: #{vae_forward.2} parent=1 // pred_fallthru
      _
    %458 = vsyncpa [#allocation3], 1

</llo_original>
